<compile_context>
chip_gen: v5e
topology: v5e:2x2
jax: 0.10.0
libtpu: 0.0.40
codegen_flags: <defaults>
</compile_context>

<pallas_src>
import jax
import jax.numpy as jnp
from jax.experimental import pallas as pl
from jax.experimental.pallas import tpu as pltpu

_MASK_VALUE = -1e30


def mha_kernel(x_ref, wqkv_ref, bqkv_ref, wp_ref, bp_ref, mask_ref,
               out_ref, attn_ref, k_s, q_s, v_s):
    """One grid step = one batch block x one key-row tile (all heads, all queries)."""
    Bb, T, C = x_ref.shape
    H = attn_ref.shape[1]
    tkb = attn_ref.shape[2]              # key-row tile size
    shs = C // H
    n = Bb * H
    cdt = wqkv_ref.dtype                 # MXU-operand dtype (bf16 default; f32 accumulation)
    kt = pl.program_id(1)

    # --- fused QKV projection: once per batch block (inner k-tile axis revisits it) ---
    @pl.when(kt == 0)
    def _project_qkv():
        # Single matmul, flop-identical to (Bb*T, C) @ (C, 3C): MXU N-width is 3C (not
        # shs) and the weights carry no batch/head dimension (no tile_b replication).
        # 1/sqrt(head_size) is already folded into Wq / bq host-side.
        qkv = jnp.einsum('btc,cd->btd', x_ref[...], wqkv_ref[...],
                         preferred_element_type=jnp.float32) + bqkv_ref[...]

        # Head split to (Bb*H, T, shs): static lane slices + one major-axis concat per
        # tensor (no lane-splitting reshape, no transpose).
        def split_heads(off):
            parts = [qkv[:, :, off + h * shs: off + (h + 1) * shs].reshape(Bb, 1, T, shs)
                     for h in range(H)]
            return jnp.concatenate(parts, axis=1).reshape(n, T, shs).astype(cdt)

        k_s[...] = split_heads(0)
        q_s[...] = split_heads(C)
        v_s[...] = split_heads(2 * C)

    # --- scores for this key-row tile ---
    # s[n, krow, q]; softmax is over the query axis (last dim), so key-row tiles are
    # fully independent -- no online-softmax carry is needed.
    k0 = pl.multiple_of(kt * tkb, tkb)
    k_tile = k_s[:, pl.ds(k0, tkb), :]                               # (n, tkb, shs)
    s = jnp.einsum('nti,nqi->ntq', k_tile, q_s[...],
                   preferred_element_type=jnp.float32)               # (n, tkb, T)
    s = s + mask_ref[...][None]          # additive mask: 0.0 kept / -1e30 masked

    # softmax over the query axis (== F.softmax(weights, dim=2) in the reference);
    # EUP approx reciprocal + one Newton step -> ~f32-exact (weights are user-visible).
    m = jnp.max(s, axis=-1, keepdims=True)
    e = jnp.exp(s - m)
    d = jnp.sum(e, axis=-1, keepdims=True)
    r = pl.reciprocal(d, approx=True)
    r = r * (2.0 - d * r)
    p = e * r                                                        # (n, tkb, T) f32

    # one head-major store of this tile's attention weights (wrapper may reorder).
    attn_ref[...] = p.reshape(Bb, H, tkb, T).astype(attn_ref.dtype)

    # --- PV matmul + fused output projection (contraction depth C, not shs) ---
    o = jnp.einsum('ntq,nqj->ntj', p.astype(cdt), v_s[...],
                   preferred_element_type=jnp.float32)               # (n, tkb, shs)
    o4 = o.reshape(Bb, H, tkb, shs)
    oc = jnp.concatenate([o4[:, h] for h in range(H)], axis=-1)      # (Bb, tkb, C)
    out = jnp.einsum('btk,kc->btc', oc.astype(cdt), wp_ref[...],
                     preferred_element_type=jnp.float32) + bp_ref[...]
    out_ref[...] = out.astype(out_ref.dtype)


def _vmem_limit_bytes(Bb, T, C, H, tkb, compute_dtype, weights_dtype):
    """Scoped-VMEM hint derived from the actual block sizes (x2 for double buffering)."""
    shs = C // H
    cb = jnp.dtype(compute_dtype).itemsize
    wb = jnp.dtype(weights_dtype).itemsize
    blocks = (Bb * T * C * cb                         # x block
              + C * 3 * C * cb + 3 * C * 4            # fused Wkqv, bias
              + C * C * cb + C * 4                    # Wp.T, bp
              + tkb * T * 4                           # mask tile
              + Bb * tkb * C * 4                      # out tile
              + Bb * H * tkb * T * wb)                # attn tile
    scratch = 3 * Bb * H * T * shs * cb               # k/q/v scratch
    interm = Bb * T * 3 * C * 4 + 4 * Bb * H * tkb * T * 4   # qkv + s/e/p/attn-cast
    est = 2 * blocks + scratch + 2 * interm + (4 << 20)
    return int(min(128 << 20, max(32 << 20, est)))


def multi_head_attention(x, params, attn_mask, *, n_heads, head_size,
                         compute_dtype=jnp.bfloat16, batch_grid=1, k_tile=None,
                         weights_dtype=jnp.float32, weights_layout="bkqh"):
    """Forward pass. Returns (out, weights): out (B,T,C) f32.

    compute_dtype:   MXU-operand dtype (bf16 default; accumulation stays f32).
    batch_grid:      'parallel' grid steps over the batch. 1 is best on a single
                     TensorCore (v5e/v6e); use 2-4 on v7x so both cores get a few
                     large steps (NOT batch_grid=B).
    k_tile:          key-row tile size (bounds the (B*H, tile, T) score/softmax block
                     and the attn output block in VMEM; halve it for v7x's 64 MiB).
    weights_dtype:   dtype of the returned attention weights (bf16 halves the dominant
                     HBM writeback stream).
    weights_layout:  "bkqh" (torch order (B,T_k,T_q,H); adds an HBM-bound transpose of
                     the largest tensor) or "bhkq" (head-major (B,H,T_k,T_q); no extra op).
    """
    B, T, C = x.shape
    assert C == head_size, "module assumes x channels == head_size"
    assert head_size % n_heads == 0
    assert B % batch_grid == 0
    assert weights_layout in ("bkqh", "bhkq")
    H, shs, Bb = n_heads, head_size // n_heads, B // batch_grid
    if k_tile is None:
        k_tile = T if T <= 128 else 128
    assert T % k_tile == 0 and (k_tile == T or k_tile % 8 == 0)
    n_kt = T // k_tile

    wk, bk, wq, bq, wv, bv, wp, bp = params
    f32 = jnp.float32
    scale = 1.0 / (head_size ** 0.5)

    # nn.Linear stores W as (out,in): y = x @ W.T + b.  Fuse K|Q|V into one (C, 3C)
    # weight (transposed host-side) and fold the 1/sqrt(head_size) scale into Wq / bq.
    wqkv = jnp.concatenate([wk.astype(f32).T, (wq.astype(f32) * scale).T,
                            wv.astype(f32).T], axis=1).astype(compute_dtype)   # (C, 3C)
    bqkv = jnp.concatenate([bk.astype(f32), bq.astype(f32) * scale,
                            bv.astype(f32)]).reshape(1, 3 * C)
    wp_t = jnp.transpose(wp.astype(f32)).astype(compute_dtype)                 # (C, C)
    bp_r = bp.astype(f32).reshape(1, C)

    # precomputed f32 additive mask (0 kept / -1e30 masked); reference masks before the
    # scale, which is equivalent here because exp(-1e30 - m) underflows to exactly 0.
    mask_add = jnp.where(attn_mask[:T, :T].astype(jnp.bool_),
                         jnp.float32(_MASK_VALUE), jnp.float32(0.0))

    out, attn = pl.pallas_call(
        mha_kernel,
        out_shape=(jax.ShapeDtypeStruct((B, T, C), f32),
                   jax.ShapeDtypeStruct((B, H, T, T), weights_dtype)),
        grid=(batch_grid, n_kt),
        in_specs=[
            pl.BlockSpec((Bb, T, C), lambda g, t: (g, 0, 0)),      # x (same block over t)
            pl.BlockSpec((C, 3 * C), lambda g, t: (0, 0)),         # fused Wkqv
            pl.BlockSpec((1, 3 * C), lambda g, t: (0, 0)),         # fused bias
            pl.BlockSpec((C, C), lambda g, t: (0, 0)),             # Wp.T
            pl.BlockSpec((1, C), lambda g, t: (0, 0)),             # bp
            pl.BlockSpec((k_tile, T), lambda g, t: (t, 0)),        # additive mask tile
        ],
        out_specs=(pl.BlockSpec((Bb, k_tile, C), lambda g, t: (g, t, 0)),
                   pl.BlockSpec((Bb, H, k_tile, T), lambda g, t: (g, 0, t, 0))),
        scratch_shapes=[pltpu.VMEM((Bb * H, T, shs), compute_dtype)] * 3,
        compiler_params=pltpu.CompilerParams(
            dimension_semantics=("parallel", "arbitrary"),
            vmem_limit_bytes=_vmem_limit_bytes(Bb, T, C, H, k_tile,
                                               compute_dtype, weights_dtype)),
    )(x.astype(compute_dtype), wqkv, bqkv, wp_t, bp_r, mask_add)

    if weights_layout == "bkqh":   # torch order; extra HBM-bound transpose of the weights
        attn = jnp.transpose(attn, (0, 2, 3, 1))
    return out, attn


def reference_forward(x, params, attn_mask, *, n_heads, head_size):
    """Pure-JAX (f32) replica of the PyTorch forward, for validation."""
    B, T, C = x.shape
    shs = head_size // n_heads
    wk, bk, wq, bq, wv, bv, wp, bp = params
    k = (x @ wk.T + bk).reshape(B, T, n_heads, shs)
    q = (x @ wq.T + bq).reshape(B, T, n_heads, shs)
    v = (x @ wv.T + bv).reshape(B, T, n_heads, shs)
    w = jnp.einsum('bkhi,bqhi->bkqh', k, q)
    w = jnp.where(attn_mask[None, :T, :T, None], -jnp.inf, w)
    w = w / head_size ** 0.5
    w = jax.nn.softmax(w, axis=2)
    out = jnp.einsum('bkqh,bqhj->bkhj', w, v).reshape(B, T, head_size)
    out = out @ wp.T + bp
    return out, w


if __name__ == "__main__":
    B, T = 2, 16
    head_size, n_heads = 32, 4

    key = jax.random.PRNGKey(0)
    keys = jax.random.split(key, 10)
    bound = 1.0 / (head_size ** 0.5)     # nn.Linear default init range

    def lin(kw, kb):
        w = jax.random.uniform(kw, (head_size, head_size), jnp.float32, -bound, bound)
        b = jax.random.uniform(kb, (head_size,), jnp.float32, -bound, bound)
        return w, b

    wk, bk = lin(keys[0], keys[1])
    wq, bq = lin(keys[2], keys[3])
    wv, bv = lin(keys[4], keys[5])
    wp, bp = lin(keys[6], keys[7])
    params = (wk, bk, wq, bq, wv, bv, wp, bp)

    x = jax.random.normal(keys[8], (B, T, head_size), jnp.float32)
    # causal-style boolean mask: True where the position should be masked out
    attn_mask = ~jnp.tril(jnp.ones((T, T), dtype=jnp.bool_))

    out_ref, w_ref = reference_forward(x, params, attn_mask,
                                       n_heads=n_heads, head_size=head_size)
    w_ref_bhkq = jnp.transpose(w_ref, (0, 3, 1, 2))

    # 1) f32 MXU operands, single key tile, torch-layout weights
    out32, w32 = multi_head_attention(x, params, attn_mask, n_heads=n_heads,
                                      head_size=head_size, compute_dtype=jnp.float32)
    out32, w32 = jax.block_until_ready((out32, w32))
    assert out32.shape == (B, T, head_size)
    assert w32.shape == (B, T, T, n_heads)
    assert jnp.allclose(out32, out_ref, atol=1e-2, rtol=1e-2)
    assert jnp.allclose(w32, w_ref, atol=1e-2, rtol=1e-2)

    # 2) default bf16 fast path + key-row tiling (2 tiles) + head-major weights (no transpose)
    out_bf, w_bf = multi_head_attention(x, params, attn_mask, n_heads=n_heads,
                                        head_size=head_size, k_tile=8,
                                        weights_layout="bhkq")
    out_bf, w_bf = jax.block_until_ready((out_bf, w_bf))
    assert w_bf.shape == (B, n_heads, T, T)
    assert jnp.allclose(out_bf, out_ref, atol=6e-2, rtol=6e-2)
    assert jnp.allclose(w_bf, w_ref_bhkq, atol=6e-2, rtol=6e-2)

    # 3) multi-core style: small 'parallel' batch grid + bf16 attention writeback
    out_p, w_p = multi_head_attention(x, params, attn_mask, n_heads=n_heads,
                                      head_size=head_size, batch_grid=2,
                                      weights_dtype=jnp.bfloat16)
    out_p, w_p = jax.block_until_ready((out_p, w_p))
    assert jnp.allclose(out_p, out_ref, atol=6e-2, rtol=6e-2)
    assert jnp.allclose(w_p.astype(jnp.float32), w_ref, atol=6e-2, rtol=6e-2)

    print("KERNEL_OK")
</pallas_src>

<mosaic_0001>
module attributes {stable_mosaic.version = 11 : i64} {
  func.func @mha_kernel(%arg0: i32, %arg1: i32, %arg2: memref<2x16x32xf32, #tpu.memory_space<vmem>>, %arg3: memref<32x96xf32, #tpu.memory_space<vmem>>, %arg4: memref<1x96xf32, #tpu.memory_space<vmem>>, %arg5: memref<32x32xf32, #tpu.memory_space<vmem>>, %arg6: memref<1x32xf32, #tpu.memory_space<vmem>>, %arg7: memref<16x16xf32, #tpu.memory_space<vmem>>, %arg8: memref<2x16x32xf32, #tpu.memory_space<vmem>>, %arg9: memref<2x4x16x16xf32, #tpu.memory_space<vmem>>, %arg10: memref<8x16x8xf32, #tpu.memory_space<vmem>>, %arg11: memref<8x16x8xf32, #tpu.memory_space<vmem>>, %arg12: memref<8x16x8xf32, #tpu.memory_space<vmem>>) attributes {dimension_semantics = [#tpu.dimension_semantics<parallel>, #tpu.dimension_semantics<arbitrary>], iteration_bounds = array<i64: 1, 1>, scalar_prefetch = 0 : i64, scratch_operands = 3 : i64, tpu.core_type = #tpu.core_type<tc>, window_params = [{transform_indices = @transform_0, window_bounds = array<i64: 2, 16, 32>}, {pipeline_mode = #tpu.pipeline_mode<synchronous>, transform_indices = @transform_1, window_bounds = array<i64: 32, 96>}, {pipeline_mode = #tpu.pipeline_mode<synchronous>, transform_indices = @transform_2, window_bounds = array<i64: 1, 96>}, {pipeline_mode = #tpu.pipeline_mode<synchronous>, transform_indices = @transform_3, window_bounds = array<i64: 32, 32>}, {pipeline_mode = #tpu.pipeline_mode<synchronous>, transform_indices = @transform_4, window_bounds = array<i64: 1, 32>}, {transform_indices = @transform_5, window_bounds = array<i64: 16, 16>}, {transform_indices = @transform_6, window_bounds = array<i64: 2, 16, 32>}, {transform_indices = @transform_7, window_bounds = array<i64: 2, 4, 16, 16>}]} {
    %c0_i32 = arith.constant 0 : i32
    %0 = arith.cmpi eq, %arg1, %c0_i32 : i32
    %1 = arith.extui %0 : i1 to i32
    %c0_i32_0 = arith.constant 0 : i32
    %2 = arith.cmpi ne, %1, %c0_i32_0 : i32
    scf.if %2 {
      %c0_26 = arith.constant 0 : index
      %c0_27 = arith.constant 0 : index
      %c0_28 = arith.constant 0 : index
      %48 = vector.load %arg2[%c0_26, %c0_27, %c0_28] : memref<2x16x32xf32, #tpu.memory_space<vmem>>, vector<2x16x32xf32>
      %c0_29 = arith.constant 0 : index
      %c0_30 = arith.constant 0 : index
      %49 = vector.load %arg3[%c0_29, %c0_30] : memref<32x96xf32, #tpu.memory_space<vmem>>, vector<32x96xf32>
      "tpu.trace_start"() <{level = 10 : i32, message = "btc,cd->btd"}> : () -> ()
      %cst_31 = arith.constant dense<0.000000e+00> : vector<2x16x96xf32>
      %50 = tpu.matmul %48, %49, %cst_31 {dimension_numbers = #tpu.dot_dimension_numbers<[2], [0], [0, 1], [1], [0, 0, 0, 1, 1, 1], [], []>} : vector<2x16x32xf32>, vector<32x96xf32>, vector<2x16x96xf32> -> vector<2x16x96xf32>
      "tpu.trace_stop"() : () -> ()
      %c0_32 = arith.constant 0 : index
      %c0_33 = arith.constant 0 : index
      %51 = vector.load %arg4[%c0_32, %c0_33] : memref<1x96xf32, #tpu.memory_space<vmem>>, vector<1x96xf32>
      %52 = vector.shape_cast %51 : vector<1x96xf32> to vector<1x1x96xf32>
      %53 = vector.broadcast %52 : vector<1x1x96xf32> to vector<2x16x96xf32>
      %54 = arith.addf %50, %53 : vector<2x16x96xf32>
      %55 = vector.extract_strided_slice %54 {offsets = [0, 0, 0], sizes = [2, 16, 8], strides = [1, 1, 1]} : vector<2x16x96xf32> to vector<2x16x8xf32>
      %56 = vector.shape_cast %55 : vector<2x16x8xf32> to vector<2x1x16x8xf32>
      %57 = vector.extract_strided_slice %54 {offsets = [0, 0, 8], sizes = [2, 16, 8], strides = [1, 1, 1]} : vector<2x16x96xf32> to vector<2x16x8xf32>
      %58 = vector.shape_cast %57 : vector<2x16x8xf32> to vector<2x1x16x8xf32>
      %59 = vector.extract_strided_slice %54 {offsets = [0, 0, 16], sizes = [2, 16, 8], strides = [1, 1, 1]} : vector<2x16x96xf32> to vector<2x16x8xf32>
      %60 = vector.shape_cast %59 : vector<2x16x8xf32> to vector<2x1x16x8xf32>
      %61 = vector.extract_strided_slice %54 {offsets = [0, 0, 24], sizes = [2, 16, 8], strides = [1, 1, 1]} : vector<2x16x96xf32> to vector<2x16x8xf32>
      %62 = vector.shape_cast %61 : vector<2x16x8xf32> to vector<2x1x16x8xf32>
      %63 = tpu.concatenate %56, %58, %60, %62 in 1 : vector<2x1x16x8xf32>, vector<2x1x16x8xf32>, vector<2x1x16x8xf32>, vector<2x1x16x8xf32> -> vector<2x4x16x8xf32>
      %64 = vector.shape_cast %63 : vector<2x4x16x8xf32> to vector<8x16x8xf32>
      %c0_34 = arith.constant 0 : index
      %c0_35 = arith.constant 0 : index
      %c0_36 = arith.constant 0 : index
      %65 = vector.load %arg10[%c0_34, %c0_35, %c0_36] : memref<8x16x8xf32, #tpu.memory_space<vmem>>, vector<8x16x8xf32>
      tpu.vector_store %arg10[%c0_34, %c0_35, %c0_36], %64 {strides = array<i32>} : memref<8x16x8xf32, #tpu.memory_space<vmem>>, vector<8x16x8xf32>,
      %66 = vector.extract_strided_slice %54 {offsets = [0, 0, 32], sizes = [2, 16, 8], strides = [1, 1, 1]} : vector<2x16x96xf32> to vector<2x16x8xf32>
      %67 = vector.shape_cast %66 : vector<2x16x8xf32> to vector<2x1x16x8xf32>
      %68 = vector.extract_strided_slice %54 {offsets = [0, 0, 40], sizes = [2, 16, 8], strides = [1, 1, 1]} : vector<2x16x96xf32> to vector<2x16x8xf32>
      %69 = vector.shape_cast %68 : vector<2x16x8xf32> to vector<2x1x16x8xf32>
      %70 = vector.extract_strided_slice %54 {offsets = [0, 0, 48], sizes = [2, 16, 8], strides = [1, 1, 1]} : vector<2x16x96xf32> to vector<2x16x8xf32>
      %71 = vector.shape_cast %70 : vector<2x16x8xf32> to vector<2x1x16x8xf32>
      %72 = vector.extract_strided_slice %54 {offsets = [0, 0, 56], sizes = [2, 16, 8], strides = [1, 1, 1]} : vector<2x16x96xf32> to vector<2x16x8xf32>
      %73 = vector.shape_cast %72 : vector<2x16x8xf32> to vector<2x1x16x8xf32>
      %74 = tpu.concatenate %67, %69, %71, %73 in 1 : vector<2x1x16x8xf32>, vector<2x1x16x8xf32>, vector<2x1x16x8xf32>, vector<2x1x16x8xf32> -> vector<2x4x16x8xf32>
      %75 = vector.shape_cast %74 : vector<2x4x16x8xf32> to vector<8x16x8xf32>
      %c0_37 = arith.constant 0 : index
      %c0_38 = arith.constant 0 : index
      %c0_39 = arith.constant 0 : index
      %76 = vector.load %arg11[%c0_37, %c0_38, %c0_39] : memref<8x16x8xf32, #tpu.memory_space<vmem>>, vector<8x16x8xf32>
      tpu.vector_store %arg11[%c0_37, %c0_38, %c0_39], %75 {strides = array<i32>} : memref<8x16x8xf32, #tpu.memory_space<vmem>>, vector<8x16x8xf32>,
      %77 = vector.extract_strided_slice %54 {offsets = [0, 0, 64], sizes = [2, 16, 8], strides = [1, 1, 1]} : vector<2x16x96xf32> to vector<2x16x8xf32>
      %78 = vector.shape_cast %77 : vector<2x16x8xf32> to vector<2x1x16x8xf32>
      %79 = vector.extract_strided_slice %54 {offsets = [0, 0, 72], sizes = [2, 16, 8], strides = [1, 1, 1]} : vector<2x16x96xf32> to vector<2x16x8xf32>
      %80 = vector.shape_cast %79 : vector<2x16x8xf32> to vector<2x1x16x8xf32>
      %81 = vector.extract_strided_slice %54 {offsets = [0, 0, 80], sizes = [2, 16, 8], strides = [1, 1, 1]} : vector<2x16x96xf32> to vector<2x16x8xf32>
      %82 = vector.shape_cast %81 : vector<2x16x8xf32> to vector<2x1x16x8xf32>
      %83 = vector.extract_strided_slice %54 {offsets = [0, 0, 88], sizes = [2, 16, 8], strides = [1, 1, 1]} : vector<2x16x96xf32> to vector<2x16x8xf32>
      %84 = vector.shape_cast %83 : vector<2x16x8xf32> to vector<2x1x16x8xf32>
      %85 = tpu.concatenate %78, %80, %82, %84 in 1 : vector<2x1x16x8xf32>, vector<2x1x16x8xf32>, vector<2x1x16x8xf32>, vector<2x1x16x8xf32> -> vector<2x4x16x8xf32>
      %86 = vector.shape_cast %85 : vector<2x4x16x8xf32> to vector<8x16x8xf32>
      %c0_40 = arith.constant 0 : index
      %c0_41 = arith.constant 0 : index
      %c0_42 = arith.constant 0 : index
      %87 = vector.load %arg12[%c0_40, %c0_41, %c0_42] : memref<8x16x8xf32, #tpu.memory_space<vmem>>, vector<8x16x8xf32>
      tpu.vector_store %arg12[%c0_40, %c0_41, %c0_42], %86 {strides = array<i32>} : memref<8x16x8xf32, #tpu.memory_space<vmem>>, vector<8x16x8xf32>,
    } else {
    }
    %c16_i32 = arith.constant 16 : i32
    %3 = arith.muli %arg1, %c16_i32 : i32
    %4 = tpu.assume_multiple %3, 16 : i32
    %c0 = arith.constant 0 : index
    %5 = arith.index_cast %4 : i32 to index
    %c0_1 = arith.constant 0 : index
    %6 = vector.load %arg10[%c0, %5, %c0_1] : memref<8x16x8xf32, #tpu.memory_space<vmem>>, vector<8x16x8xf32>
    %c0_2 = arith.constant 0 : index
    %c0_3 = arith.constant 0 : index
    %c0_4 = arith.constant 0 : index
    %7 = vector.load %arg11[%c0_2, %c0_3, %c0_4] : memref<8x16x8xf32, #tpu.memory_space<vmem>>, vector<8x16x8xf32>
    "tpu.trace_start"() <{level = 10 : i32, message = "nti,nqi->ntq"}> : () -> ()
    %cst = arith.constant dense<0.000000e+00> : vector<8x16x16xf32>
    %8 = tpu.matmul %6, %7, %cst {dimension_numbers = #tpu.dot_dimension_numbers<[2], [2], [1], [1], [0, 0, 0, 1, 1, 1], [0], [0]>} : vector<8x16x8xf32>, vector<8x16x8xf32>, vector<8x16x16xf32> -> vector<8x16x16xf32>
    "tpu.trace_stop"() : () -> ()
    %c0_5 = arith.constant 0 : index
    %c0_6 = arith.constant 0 : index
    %9 = vector.load %arg7[%c0_5, %c0_6] : memref<16x16xf32, #tpu.memory_space<vmem>>, vector<16x16xf32>
    %10 = vector.shape_cast %9 : vector<16x16xf32> to vector<1x16x16xf32>
    %11 = vector.broadcast %10 : vector<1x16x16xf32> to vector<8x16x16xf32>
    %12 = arith.addf %8, %11 : vector<8x16x16xf32>
    %cst_7 = arith.constant dense<0xFF800000> : vector<8x16xf32>
    %13 = vector.multi_reduction <maximumf>, %12, %cst_7 [2] : vector<8x16x16xf32> to vector<8x16xf32>
    %14 = vector.shape_cast %13 : vector<8x16xf32> to vector<8x16x1xf32>
    %15 = vector.broadcast %14 : vector<8x16x1xf32> to vector<8x16x16xf32>
    %16 = arith.subf %12, %15 : vector<8x16x16xf32>
    %17 = math.exp %16 : vector<8x16x16xf32>
    %cst_8 = arith.constant dense<0.000000e+00> : vector<8x16xf32>
    %18 = vector.multi_reduction <add>, %17, %cst_8 [2] : vector<8x16x16xf32> to vector<8x16xf32>
    %19 = vector.shape_cast %18 : vector<8x16xf32> to vector<8x16x1xf32>
    %20 = tpu.reciprocal %19 {approx = true} : vector<8x16x1xf32> -> vector<8x16x1xf32>
    %21 = arith.mulf %19, %20 : vector<8x16x1xf32>
    %cst_9 = arith.constant 2.000000e+00 : f32
    %22 = vector.broadcast %cst_9 : f32 to vector<8x16x1xf32>
    %23 = arith.subf %22, %21 : vector<8x16x1xf32>
    %24 = arith.mulf %20, %23 : vector<8x16x1xf32>
    %25 = vector.broadcast %24 : vector<8x16x1xf32> to vector<8x16x16xf32>
    %26 = arith.mulf %17, %25 : vector<8x16x16xf32>
    %27 = vector.shape_cast %26 : vector<8x16x16xf32> to vector<2x4x16x16xf32>
    %c0_10 = arith.constant 0 : index
    %c0_11 = arith.constant 0 : index
    %c0_12 = arith.constant 0 : index
    %c0_13 = arith.constant 0 : index
    %28 = vector.load %arg9[%c0_10, %c0_11, %c0_12, %c0_13] : memref<2x4x16x16xf32, #tpu.memory_space<vmem>>, vector<2x4x16x16xf32>
    tpu.vector_store %arg9[%c0_10, %c0_11, %c0_12, %c0_13], %27 {strides = array<i32>} : memref<2x4x16x16xf32, #tpu.memory_space<vmem>>, vector<2x4x16x16xf32>,
    %c0_14 = arith.constant 0 : index
    %c0_15 = arith.constant 0 : index
    %c0_16 = arith.constant 0 : index
    %29 = vector.load %arg12[%c0_14, %c0_15, %c0_16] : memref<8x16x8xf32, #tpu.memory_space<vmem>>, vector<8x16x8xf32>
    "tpu.trace_start"() <{level = 10 : i32, message = "ntq,nqj->ntj"}> : () -> ()
    %cst_17 = arith.constant dense<0.000000e+00> : vector<8x16x8xf32>
    %30 = tpu.matmul %26, %29, %cst_17 {dimension_numbers = #tpu.dot_dimension_numbers<[2], [1], [1], [2], [0, 0, 0, 1, 1, 2], [0], [0]>} : vector<8x16x16xf32>, vector<8x16x8xf32>, vector<8x16x8xf32> -> vector<8x16x8xf32>
    "tpu.trace_stop"() : () -> ()
    %31 = vector.shape_cast %30 : vector<8x16x8xf32> to vector<2x4x16x8xf32>
    %32 = vector.extract_strided_slice %31 {offsets = [0, 0, 0, 0], sizes = [2, 1, 16, 8], strides = [1, 1, 1, 1]} : vector<2x4x16x8xf32> to vector<2x1x16x8xf32>
    %33 = vector.shape_cast %32 : vector<2x1x16x8xf32> to vector<2x16x8xf32>
    %34 = vector.extract_strided_slice %31 {offsets = [0, 1, 0, 0], sizes = [2, 1, 16, 8], strides = [1, 1, 1, 1]} : vector<2x4x16x8xf32> to vector<2x1x16x8xf32>
    %35 = vector.shape_cast %34 : vector<2x1x16x8xf32> to vector<2x16x8xf32>
    %36 = vector.extract_strided_slice %31 {offsets = [0, 2, 0, 0], sizes = [2, 1, 16, 8], strides = [1, 1, 1, 1]} : vector<2x4x16x8xf32> to vector<2x1x16x8xf32>
    %37 = vector.shape_cast %36 : vector<2x1x16x8xf32> to vector<2x16x8xf32>
    %38 = vector.extract_strided_slice %31 {offsets = [0, 3, 0, 0], sizes = [2, 1, 16, 8], strides = [1, 1, 1, 1]} : vector<2x4x16x8xf32> to vector<2x1x16x8xf32>
    %39 = vector.shape_cast %38 : vector<2x1x16x8xf32> to vector<2x16x8xf32>
    %40 = tpu.concatenate %33, %35, %37, %39 in 2 : vector<2x16x8xf32>, vector<2x16x8xf32>, vector<2x16x8xf32>, vector<2x16x8xf32> -> vector<2x16x32xf32>
    %c0_18 = arith.constant 0 : index
    %c0_19 = arith.constant 0 : index
    %41 = vector.load %arg5[%c0_18, %c0_19] : memref<32x32xf32, #tpu.memory_space<vmem>>, vector<32x32xf32>
    "tpu.trace_start"() <{level = 10 : i32, message = "btk,kc->btc"}> : () -> ()
    %cst_20 = arith.constant dense<0.000000e+00> : vector<2x16x32xf32>
    %42 = tpu.matmul %40, %41, %cst_20 {dimension_numbers = #tpu.dot_dimension_numbers<[2], [0], [0, 1], [1], [0, 0, 0, 1, 1, 1], [], []>} : vector<2x16x32xf32>, vector<32x32xf32>, vector<2x16x32xf32> -> vector<2x16x32xf32>
    "tpu.trace_stop"() : () -> ()
    %c0_21 = arith.constant 0 : index
    %c0_22 = arith.constant 0 : index
    %43 = vector.load %arg6[%c0_21, %c0_22] : memref<1x32xf32, #tpu.memory_space<vmem>>, vector<1x32xf32>
    %44 = vector.shape_cast %43 : vector<1x32xf32> to vector<1x1x32xf32>
    %45 = vector.broadcast %44 : vector<1x1x32xf32> to vector<2x16x32xf32>
    %46 = arith.addf %42, %45 : vector<2x16x32xf32>
    %c0_23 = arith.constant 0 : index
    %c0_24 = arith.constant 0 : index
    %c0_25 = arith.constant 0 : index
    %47 = vector.load %arg8[%c0_23, %c0_24, %c0_25] : memref<2x16x32xf32, #tpu.memory_space<vmem>>, vector<2x16x32xf32>
    tpu.vector_store %arg8[%c0_23, %c0_24, %c0_25], %46 {strides = array<i32>} : memref<2x16x32xf32, #tpu.memory_space<vmem>>, vector<2x16x32xf32>,
    return
  }
  func.func @transform_0(%arg0: i32, %arg1: i32) -> (i32, i32, i32) {
    %c0_i32 = arith.constant 0 : i32
    %c0_i32_0 = arith.constant 0 : i32
    %c0_i32_1 = arith.constant 0 : i32
    return %arg0, %c0_i32, %c0_i32_0 : i32, i32, i32
  }
  func.func @transform_1(%arg0: i32, %arg1: i32) -> (i32, i32) {
    %c0_i32 = arith.constant 0 : i32
    %c0_i32_0 = arith.constant 0 : i32
    %c0_i32_1 = arith.constant 0 : i32
    return %c0_i32, %c0_i32_0 : i32, i32
  }
  func.func @transform_2(%arg0: i32, %arg1: i32) -> (i32, i32) {
    %c0_i32 = arith.constant 0 : i32
    %c0_i32_0 = arith.constant 0 : i32
    %c0_i32_1 = arith.constant 0 : i32
    return %c0_i32, %c0_i32_0 : i32, i32
  }
  func.func @transform_3(%arg0: i32, %arg1: i32) -> (i32, i32) {
    %c0_i32 = arith.constant 0 : i32
    %c0_i32_0 = arith.constant 0 : i32
    %c0_i32_1 = arith.constant 0 : i32
    return %c0_i32, %c0_i32_0 : i32, i32
  }
  func.func @transform_4(%arg0: i32, %arg1: i32) -> (i32, i32) {
    %c0_i32 = arith.constant 0 : i32
    %c0_i32_0 = arith.constant 0 : i32
    %c0_i32_1 = arith.constant 0 : i32
    return %c0_i32, %c0_i32_0 : i32, i32
  }
  func.func @transform_5(%arg0: i32, %arg1: i32) -> (i32, i32) {
    %c0_i32 = arith.constant 0 : i32
    %c0_i32_0 = arith.constant 0 : i32
    return %arg1, %c0_i32 : i32, i32
  }
  func.func @transform_6(%arg0: i32, %arg1: i32) -> (i32, i32, i32) {
    %c0_i32 = arith.constant 0 : i32
    %c0_i32_0 = arith.constant 0 : i32
    return %arg0, %arg1, %c0_i32 : i32, i32, i32
  }
  func.func @transform_7(%arg0: i32, %arg1: i32) -> (i32, i32, i32, i32) {
    %c0_i32 = arith.constant 0 : i32
    %c0_i32_0 = arith.constant 0 : i32
    %c0_i32_1 = arith.constant 0 : i32
    return %arg0, %c0_i32, %arg1, %c0_i32_0 : i32, i32, i32, i32
  }
}

</mosaic_0001>

<llo_original>
// kernel: tpu_custom_call.1
$region0: #{tpu_custom_call.1}
  #allocation0 [shape = 'u32[]', space=smem, size = 0x4, offset = 0x4, fixed_abs, tag = 'smem constant byte address 0x4 - core index']
  #allocation1 [shape = 'u32[72,128]{1,0:T(1,128)}', space=vmem, size = 0x9000, scoped, tag = 'internal scratch']
  #allocation2 [shape = 'f32[8,16,8]{2,1,0:T(8,128)}', space=vmem, size = 0x10000, scoped, tag = 'scratch operand']
  #allocation3 [shape = 'f32[8,16,8]{2,1,0:T(8,128)}', space=vmem, size = 0x10000, scoped, tag = 'scratch operand']
  #allocation4 [shape = 'f32[8,16,8]{2,1,0:T(8,128)}', space=vmem, size = 0x10000, scoped, tag = 'scratch operand']
  %s0 = inlined_call_operand.hbm [shape: f32[2,16,32], index: 0, kind: input, shape index: {}]
  %s1 = inlined_call_operand.hbm [shape: f32[32,96], index: 1, kind: input, shape index: {}]
  %s2 = inlined_call_operand.vmem [shape: f32[1,96], index: 2, kind: input, shape index: {}]
  %s3 = inlined_call_operand.hbm [shape: f32[32,32], index: 3, kind: input, shape index: {}]
  %s4 = inlined_call_operand.vmem [shape: f32[1,32], index: 4, kind: input, shape index: {}]
  %s5 = inlined_call_operand.hbm [shape: f32[16,16], index: 5, kind: input, shape index: {}]
  %s6 = inlined_call_operand.hbm [shape: f32[2,16,32], index: 6, kind: output, shape index: {0}]
  %s7 = inlined_call_operand.hbm [shape: f32[2,4,16,16], index: 7, kind: output, shape index: {1}]
  %8 = xla_tuple %s6, %s7
  %s9 = sld [smem:[#allocation0]]
  $region62: #{tpu_custom_call.1} parent=0
    _
  %s11 = ssub.s32 1, %s9
  %s12 = scalar_select 0, %s11, %s9
  $region1: #{tpu_custom_call.1} parent=0
    #allocation5 [shape = 'u8[16384]{0}', space=vmem, size = 0x4000, scoped, tag = 'input window, operand 0, single buffered']
    #allocation6 [shape = 's32[1]{0}', space=sflag, size = 0x4, scoped, tag = 'scoped memory for tpu_custom_call.1']
    #allocation7 [shape = 's32[1]{0}', space=sflag, size = 0x4, scoped, tag = 'scoped memory for tpu_custom_call.1']
    #allocation8 [shape = 'u8[16384]{0}', space=vmem, size = 0x4000, scoped, tag = 'input window, operand 1, single buffered']
    #allocation9 [shape = 's32[1]{0}', space=sflag, size = 0x4, scoped, tag = 'scoped memory for tpu_custom_call.1']
    #allocation10 [shape = 'u8[16384]{0}', space=vmem, size = 0x4000, scoped, tag = 'input window, operand 3, single buffered']
    #allocation11 [shape = 'u8[8192]{0}', space=vmem, size = 0x2000, scoped, tag = 'input window, operand 5, single buffered']
    #allocation12 [shape = 's32[1]{0}', space=sflag, size = 0x4, scoped, tag = 'scoped memory for tpu_custom_call.1']
    #allocation13 [shape = 'u8[16384]{0}', space=vmem, size = 0x4000, scoped, tag = 'output window, operand 0, single buffered']
    #allocation14 [shape = 'u8[65536]{0}', space=vmem, size = 0x10000, scoped, tag = 'output window, operand 1, single buffered']
    #allocation15 [shape = 's32[1]{0}', space=sflag, size = 0x4, scoped, tag = 'scoped memory for tpu_custom_call.1']
    %13 = vsyncpa [#allocation6], 0
    %14 = vsyncpa [#allocation9], 0
    %15 = vsyncpa [#allocation12], 0
    %16 = vsyncpa [#allocation7], 0
    %17 = vsyncpa [#allocation15], 0
    // Predicated region
    $region2: #{tpu_custom_call.1} parent=1 // pred_check
      _
    $region3: #{tpu_custom_call.1} parent=1 // pred_check_branch
      %19 = sbr.rel (0) target = $region5
    $region4: #{tpu_custom_call.1} parent=1 // pred_region
      %21 = vsyncadd [#allocation6], 0
      %s22 = sshll.u32 %s0, 4
      %s23 = int_to_ptr.hbm [resolvable:$true] %s22
      %s24 = sshll.u32 [#allocation5], 4
      %s25 = int_to_ptr.vmem [resolvable:$true] %s24
      %30 = dma.hbm_to_vmem [thread:$0]  %s23, 512, %s25, [#allocation6], 128, 128, 8
    $region5: #{tpu_custom_call.1} parent=1 // pred_fallthru
      _
    // Predicated region
    $region6: #{tpu_custom_call.1} parent=1 // pred_check
      _
    $region7: #{tpu_custom_call.1} parent=1 // pred_check_branch
      %32 = sbr.rel (0) target = $region9
    $region8: #{tpu_custom_call.1} parent=1 // pred_region
      %34 = vsyncadd [#allocation9], 0
      %s35 = sshll.u32 %s1, 4
      %s36 = int_to_ptr.hbm [resolvable:$true] %s35
      %s37 = sshll.u32 [#allocation8], 4
      %s38 = int_to_ptr.vmem [resolvable:$true] %s37
      %43 = dma.hbm_to_vmem [thread:$0]  %s36, 512, %s38, [#allocation9], 128, 128, 8
    $region9: #{tpu_custom_call.1} parent=1 // pred_fallthru
      _
    // Predicated region
    $region10: #{tpu_custom_call.1} parent=1 // pred_check
      _
    $region11: #{tpu_custom_call.1} parent=1 // pred_check_branch
      %45 = sbr.rel (0) target = $region13
    $region12: #{tpu_custom_call.1} parent=1 // pred_region
      _
    $region13: #{tpu_custom_call.1} parent=1 // pred_fallthru
      _
    // Predicated region
    $region14: #{tpu_custom_call.1} parent=1 // pred_check
      _
    $region15: #{tpu_custom_call.1} parent=1 // pred_check_branch
      %47 = sbr.rel (0) target = $region17
    $region16: #{tpu_custom_call.1} parent=1 // pred_region
      %49 = vsyncadd [#allocation9], 0
      %s50 = sshll.u32 %s3, 4
      %s51 = int_to_ptr.hbm [resolvable:$true] %s50
      %s52 = sshll.u32 [#allocation10], 4
      %s53 = int_to_ptr.vmem [resolvable:$true] %s52
      %58 = dma.hbm_to_vmem [thread:$0]  %s51, 512, %s53, [#allocation9], 128, 128, 8
    $region17: #{tpu_custom_call.1} parent=1 // pred_fallthru
      _
    // Predicated region
    $region18: #{tpu_custom_call.1} parent=1 // pred_check
      _
    $region19: #{tpu_custom_call.1} parent=1 // pred_check_branch
      %60 = sbr.rel (0) target = $region21
    $region20: #{tpu_custom_call.1} parent=1 // pred_region
      _
    $region21: #{tpu_custom_call.1} parent=1 // pred_fallthru
      _
    // Predicated region
    $region22: #{tpu_custom_call.1} parent=1 // pred_check
      _
    $region23: #{tpu_custom_call.1} parent=1 // pred_check_branch
      %62 = sbr.rel (0) target = $region25
    $region24: #{tpu_custom_call.1} parent=1 // pred_region
      %64 = vsyncadd [#allocation12], 0
      %s65 = sshll.u32 %s5, 4
      %s66 = int_to_ptr.hbm [resolvable:$true] %s65
      %s67 = sshll.u32 [#allocation11], 4
      %s68 = int_to_ptr.vmem [resolvable:$true] %s67
      %73 = dma.hbm_to_vmem [thread:$0]  %s66, 256, %s68, [#allocation12], 128, 128, 8
    $region25: #{tpu_custom_call.1} parent=1 // pred_fallthru
      _
    // Predicated region
    $region26: #{tpu_custom_call.1} parent=1 // pred_check
      _
    $region27: #{tpu_custom_call.1} parent=1 // pred_check_branch
      %75 = sbr.rel (0) target = $region29
    $region28: #{tpu_custom_call.1} parent=1 // pred_region
      %77 = dma.done [#allocation6], 512
    $region29: #{tpu_custom_call.1} parent=1 // pred_fallthru
      _
    // Predicated region
    $region30: #{tpu_custom_call.1} parent=1 // pred_check
      _
    $region31: #{tpu_custom_call.1} parent=1 // pred_check_branch
      %79 = sbr.rel (0) target = $region33
    $region32: #{tpu_custom_call.1} parent=1 // pred_region
      %81 = dma.done [#allocation9], 512
    $region33: #{tpu_custom_call.1} parent=1 // pred_fallthru
      _
    // Predicated region
    $region34: #{tpu_custom_call.1} parent=1 // pred_check
      _
    $region35: #{tpu_custom_call.1} parent=1 // pred_check_branch
      %83 = sbr.rel (0) target = $region37
    $region36: #{tpu_custom_call.1} parent=1 // pred_region
      %85 = dma.done [#allocation9], 512
    $region37: #{tpu_custom_call.1} parent=1 // pred_fallthru
      _
    // Predicated region
    $region38: #{tpu_custom_call.1} parent=1 // pred_check
      _
    $region39: #{tpu_custom_call.1} parent=1 // pred_check_branch
      %87 = sbr.rel (0) target = $region41
    $region40: #{tpu_custom_call.1} parent=1 // pred_region
      %89 = dma.done [#allocation12], 256
    $region41: #{tpu_custom_call.1} parent=1 // pred_fallthru
      _
    %p90 = scmp.eq.s32.totalorder 0, 0
    // Predicated region
    $region42: #{tpu_custom_call.1} parent=1 // pred_check
      %p91 = pneg %p90
    $region43: #{tpu_custom_call.1} parent=1 // pred_check_branch
      %93 = sbr.rel (%p91) target = $region45
    $region44: #{tpu_custom_call.1} parent=1 // pred_region
      %v94 = vld [vmem:[#allocation5] sm:$0xff]
      %v95 = vld [vmem:[#allocation5 + $0x8] sm:$0xff]
      %v96 = vld [vmem:[#allocation5 + $0x10] sm:$0xff]
      %v97 = vld [vmem:[#allocation5 + $0x18] sm:$0xff]
      %v98 = vld [vmem:[#allocation8] sm:$0xff]
      %v99 = vld [vmem:[#allocation8 + $0x8] sm:$0xff]
      %v100 = vld [vmem:[#allocation8 + $0x10] sm:$0xff]
      %v101 = vld [vmem:[#allocation8 + $0x18] sm:$0xff]
      %v102 = vld [vmem:[%s2] sm:$0x1]
      %v104 = vperm.slane %v102, 0
      %vm106 = vcmask 261120
      %v108 = vsel %vm106, %v94, 0
      %v111 = vsel %vm106, %v95, 0
      %v114 = vsel %vm106, %v96, 0
      %v117 = vsel %vm106, %v97, 0
      %119 = vmatpush.msra.mxu0 0.0
      %120 = vmatpush.msra.mxu0 0.0
      %121 = vmatpush.msra.mxu0 0.0
      %122 = vmatpush.msra.mxu0 0.0
      %123 = vmatpush.msra.mxu0 0.0
      %124 = vmatpush.msra.mxu0 0.0
      %125 = vmatpush.msra.mxu0 0.0
      %126 = vmatpush.msra.mxu0 0.0
      %127 = vmatpush.msra.mxu0 0.0
      %128 = vmatpush.msra.mxu0 0.0
      %129 = vmatpush.msra.mxu0 0.0
      %130 = vmatpush.msra.mxu0 0.0
      %131 = vmatpush.msra.mxu0 %v101
      %132 = vmatpush.msra.mxu0 %v100
      %133 = vmatpush.msra.mxu0 %v99
      %134 = vmatpush.msra.mxu0 %v98
      %135 = vmatmul.f32.gmra.mxu0 %v108
      %v136 = vpop.f32.mrf.mxu0
      %v137 = vadd.f32 %v104, %v136
      %138 = vmatmul.f32.gmra.mxu0 %v111
      %v139 = vpop.f32.mrf.mxu0
      %v140 = vadd.f32 %v104, %v139
      %141 = vmatmul.f32.gmra.mxu0 %v114
      %v142 = vpop.f32.mrf.mxu0
      %v143 = vadd.f32 %v104, %v142
      %144 = vmatmul.f32.gmra.mxu0 %v117
      %v145 = vpop.f32.mrf.mxu0
      %v146 = vadd.f32 %v104, %v145
      %147 = vdwg.mxu0
      %152 = vrot.lane.b32.xlu0 %v137, 120
      %v153 = vpop.permute.xlu0 %152
      %154 = vrot.lane.b32.xlu0 %v140, 120
      %v155 = vpop.permute.xlu0 %154
      %156 = vrot.lane.b32.xlu0 %v143, 120
      %v157 = vpop.permute.xlu0 %156
      %158 = vrot.lane.b32.xlu0 %v146, 120
      %v159 = vpop.permute.xlu0 %158
      %164 = vrot.lane.b32.xlu0 %v137, 112
      %v165 = vpop.permute.xlu0 %164
      %166 = vrot.lane.b32.xlu0 %v140, 112
      %v167 = vpop.permute.xlu0 %166
      %168 = vrot.lane.b32.xlu0 %v143, 112
      %v169 = vpop.permute.xlu0 %168
      %170 = vrot.lane.b32.xlu0 %v146, 112
      %v171 = vpop.permute.xlu0 %170
      %176 = vrot.lane.b32.xlu0 %v137, 104
      %v177 = vpop.permute.xlu0 %176
      %178 = vrot.lane.b32.xlu0 %v140, 104
      %v179 = vpop.permute.xlu0 %178
      %180 = vrot.lane.b32.xlu0 %v143, 104
      %v181 = vpop.permute.xlu0 %180
      %182 = vrot.lane.b32.xlu0 %v146, 104
      %v183 = vpop.permute.xlu0 %182
      %vm188 = vcmask 64512
      %189 = vst.msk [vmem:[#allocation2] sm:$0xff] %vm188, %v137
      %190 = vst.msk [vmem:[#allocation2 + $0x8] sm:$0xff] %vm188, %v140
      %191 = vst.msk [vmem:[#allocation2 + $0x10] sm:$0xff] %vm188, %v153
      %192 = vst.msk [vmem:[#allocation2 + $0x18] sm:$0xff] %vm188, %v155
      %193 = vst.msk [vmem:[#allocation2 + $0x20] sm:$0xff] %vm188, %v165
      %194 = vst.msk [vmem:[#allocation2 + $0x28] sm:$0xff] %vm188, %v167
      %195 = vst.msk [vmem:[#allocation2 + $0x30] sm:$0xff] %vm188, %v177
      %196 = vst.msk [vmem:[#allocation2 + $0x38] sm:$0xff] %vm188, %v179
      %197 = vst.msk [vmem:[#allocation2 + $0x40] sm:$0xff] %vm188, %v143
      %198 = vst.msk [vmem:[#allocation2 + $0x48] sm:$0xff] %vm188, %v146
      %199 = vst.msk [vmem:[#allocation2 + $0x50] sm:$0xff] %vm188, %v157
      %200 = vst.msk [vmem:[#allocation2 + $0x58] sm:$0xff] %vm188, %v159
      %201 = vst.msk [vmem:[#allocation2 + $0x60] sm:$0xff] %vm188, %v169
      %202 = vst.msk [vmem:[#allocation2 + $0x68] sm:$0xff] %vm188, %v171
      %203 = vst.msk [vmem:[#allocation2 + $0x70] sm:$0xff] %vm188, %v181
      %204 = vst.msk [vmem:[#allocation2 + $0x78] sm:$0xff] %vm188, %v183
      %205 = vrot.lane.b32.xlu0 %v137, 96
      %v206 = vpop.permute.xlu0 %205
      %207 = vrot.lane.b32.xlu0 %v140, 96
      %v208 = vpop.permute.xlu0 %207
      %209 = vrot.lane.b32.xlu0 %v153, 96
      %v210 = vpop.permute.xlu0 %209
      %211 = vrot.lane.b32.xlu0 %v155, 96
      %v212 = vpop.permute.xlu0 %211
      %213 = vrot.lane.b32.xlu0 %v165, 96
      %v214 = vpop.permute.xlu0 %213
      %215 = vrot.lane.b32.xlu0 %v167, 96
      %v216 = vpop.permute.xlu0 %215
      %217 = vrot.lane.b32.xlu0 %v177, 96
      %v218 = vpop.permute.xlu0 %217
      %219 = vrot.lane.b32.xlu0 %v179, 96
      %v220 = vpop.permute.xlu0 %219
      %221 = vrot.lane.b32.xlu0 %v143, 96
      %v222 = vpop.permute.xlu0 %221
      %223 = vrot.lane.b32.xlu0 %v146, 96
      %v224 = vpop.permute.xlu0 %223
      %225 = vrot.lane.b32.xlu0 %v157, 96
      %v226 = vpop.permute.xlu0 %225
      %227 = vrot.lane.b32.xlu0 %v159, 96
      %v228 = vpop.permute.xlu0 %227
      %229 = vrot.lane.b32.xlu0 %v169, 96
      %v230 = vpop.permute.xlu0 %229
      %231 = vrot.lane.b32.xlu0 %v171, 96
      %v232 = vpop.permute.xlu0 %231
      %233 = vrot.lane.b32.xlu0 %v181, 96
      %v234 = vpop.permute.xlu0 %233
      %235 = vrot.lane.b32.xlu0 %v183, 96
      %v236 = vpop.permute.xlu0 %235
      %253 = vst.msk [vmem:[#allocation3] sm:$0xff] %vm188, %v206
      %254 = vst.msk [vmem:[#allocation3 + $0x8] sm:$0xff] %vm188, %v208
      %255 = vst.msk [vmem:[#allocation3 + $0x10] sm:$0xff] %vm188, %v210
      %256 = vst.msk [vmem:[#allocation3 + $0x18] sm:$0xff] %vm188, %v212
      %257 = vst.msk [vmem:[#allocation3 + $0x20] sm:$0xff] %vm188, %v214
      %258 = vst.msk [vmem:[#allocation3 + $0x28] sm:$0xff] %vm188, %v216
      %259 = vst.msk [vmem:[#allocation3 + $0x30] sm:$0xff] %vm188, %v218
      %260 = vst.msk [vmem:[#allocation3 + $0x38] sm:$0xff] %vm188, %v220
      %261 = vst.msk [vmem:[#allocation3 + $0x40] sm:$0xff] %vm188, %v222
      %262 = vst.msk [vmem:[#allocation3 + $0x48] sm:$0xff] %vm188, %v224
      %263 = vst.msk [vmem:[#allocation3 + $0x50] sm:$0xff] %vm188, %v226
      %264 = vst.msk [vmem:[#allocation3 + $0x58] sm:$0xff] %vm188, %v228
      %265 = vst.msk [vmem:[#allocation3 + $0x60] sm:$0xff] %vm188, %v230
      %266 = vst.msk [vmem:[#allocation3 + $0x68] sm:$0xff] %vm188, %v232
      %267 = vst.msk [vmem:[#allocation3 + $0x70] sm:$0xff] %vm188, %v234
      %268 = vst.msk [vmem:[#allocation3 + $0x78] sm:$0xff] %vm188, %v236
      %269 = vrot.lane.b32.xlu0 %v137, 64
      %v270 = vpop.permute.xlu0 %269
      %271 = vrot.lane.b32.xlu0 %v140, 64
      %v272 = vpop.permute.xlu0 %271
      %273 = vrot.lane.b32.xlu0 %v153, 64
      %v274 = vpop.permute.xlu0 %273
      %275 = vrot.lane.b32.xlu0 %v155, 64
      %v276 = vpop.permute.xlu0 %275
      %277 = vrot.lane.b32.xlu0 %v165, 64
      %v278 = vpop.permute.xlu0 %277
      %279 = vrot.lane.b32.xlu0 %v167, 64
      %v280 = vpop.permute.xlu0 %279
      %281 = vrot.lane.b32.xlu0 %v177, 64
      %v282 = vpop.permute.xlu0 %281
      %283 = vrot.lane.b32.xlu0 %v179, 64
      %v284 = vpop.permute.xlu0 %283
      %285 = vrot.lane.b32.xlu0 %v143, 64
      %v286 = vpop.permute.xlu0 %285
      %287 = vrot.lane.b32.xlu0 %v146, 64
      %v288 = vpop.permute.xlu0 %287
      %289 = vrot.lane.b32.xlu0 %v157, 64
      %v290 = vpop.permute.xlu0 %289
      %291 = vrot.lane.b32.xlu0 %v159, 64
      %v292 = vpop.permute.xlu0 %291
      %293 = vrot.lane.b32.xlu0 %v169, 64
      %v294 = vpop.permute.xlu0 %293
      %295 = vrot.lane.b32.xlu0 %v171, 64
      %v296 = vpop.permute.xlu0 %295
      %297 = vrot.lane.b32.xlu0 %v181, 64
      %v298 = vpop.permute.xlu0 %297
      %299 = vrot.lane.b32.xlu0 %v183, 64
      %v300 = vpop.permute.xlu0 %299
      %317 = vst.msk [vmem:[#allocation4] sm:$0xff] %vm188, %v270
      %318 = vst.msk [vmem:[#allocation4 + $0x8] sm:$0xff] %vm188, %v272
      %319 = vst.msk [vmem:[#allocation4 + $0x10] sm:$0xff] %vm188, %v274
      %320 = vst.msk [vmem:[#allocation4 + $0x18] sm:$0xff] %vm188, %v276
      %321 = vst.msk [vmem:[#allocation4 + $0x20] sm:$0xff] %vm188, %v278
      %322 = vst.msk [vmem:[#allocation4 + $0x28] sm:$0xff] %vm188, %v280
      %323 = vst.msk [vmem:[#allocation4 + $0x30] sm:$0xff] %vm188, %v282
      %324 = vst.msk [vmem:[#allocation4 + $0x38] sm:$0xff] %vm188, %v284
      %325 = vst.msk [vmem:[#allocation4 + $0x40] sm:$0xff] %vm188, %v286
      %326 = vst.msk [vmem:[#allocation4 + $0x48] sm:$0xff] %vm188, %v288
      %327 = vst.msk [vmem:[#allocation4 + $0x50] sm:$0xff] %vm188, %v290
      %328 = vst.msk [vmem:[#allocation4 + $0x58] sm:$0xff] %vm188, %v292
      %329 = vst.msk [vmem:[#allocation4 + $0x60] sm:$0xff] %vm188, %v294
      %330 = vst.msk [vmem:[#allocation4 + $0x68] sm:$0xff] %vm188, %v296
      %331 = vst.msk [vmem:[#allocation4 + $0x70] sm:$0xff] %vm188, %v298
      %332 = vst.msk [vmem:[#allocation4 + $0x78] sm:$0xff] %vm188, %v300
    $region45: #{tpu_custom_call.1} parent=1 // pred_fallthru
      _
    %s333 = smul.u32 0, 16
    %s334 = scalar_lea.vmem [#allocation2], %s333
    %v335 = vld [vmem:[%s334] sm:$0xff]
    %v336 = vld [vmem:[%s334 + $0x8] sm:$0xff]
    %v337 = vld [vmem:[%s334 + $0x10] sm:$0xff]
    %v338 = vld [vmem:[%s334 + $0x18] sm:$0xff]
    %v339 = vld [vmem:[%s334 + $0x20] sm:$0xff]
    %v340 = vld [vmem:[%s334 + $0x28] sm:$0xff]
    %v341 = vld [vmem:[%s334 + $0x30] sm:$0xff]
    %v342 = vld [vmem:[%s334 + $0x38] sm:$0xff]
    %v343 = vld [vmem:[%s334 + $0x40] sm:$0xff]
    %v344 = vld [vmem:[%s334 + $0x48] sm:$0xff]
    %v345 = vld [vmem:[%s334 + $0x50] sm:$0xff]
    %v346 = vld [vmem:[%s334 + $0x58] sm:$0xff]
    %v347 = vld [vmem:[%s334 + $0x60] sm:$0xff]
    %v348 = vld [vmem:[%s334 + $0x68] sm:$0xff]
    %v349 = vld [vmem:[%s334 + $0x70] sm:$0xff]
    %v350 = vld [vmem:[%s334 + $0x78] sm:$0xff]
    %v351 = vld [vmem:[#allocation3] sm:$0xff]
    %v352 = vld [vmem:[#allocation3 + $0x8] sm:$0xff]
    %v353 = vld [vmem:[#allocation3 + $0x10] sm:$0xff]
    %v354 = vld [vmem:[#allocation3 + $0x18] sm:$0xff]
    %v355 = vld [vmem:[#allocation3 + $0x20] sm:$0xff]
    %v356 = vld [vmem:[#allocation3 + $0x28] sm:$0xff]
    %v357 = vld [vmem:[#allocation3 + $0x30] sm:$0xff]
    %v358 = vld [vmem:[#allocation3 + $0x38] sm:$0xff]
    %v359 = vld [vmem:[#allocation3 + $0x40] sm:$0xff]
    %v360 = vld [vmem:[#allocation3 + $0x48] sm:$0xff]
    %v361 = vld [vmem:[#allocation3 + $0x50] sm:$0xff]
    %v362 = vld [vmem:[#allocation3 + $0x58] sm:$0xff]
    %v363 = vld [vmem:[#allocation3 + $0x60] sm:$0xff]
    %v364 = vld [vmem:[#allocation3 + $0x68] sm:$0xff]
    %v365 = vld [vmem:[#allocation3 + $0x70] sm:$0xff]
    %v366 = vld [vmem:[#allocation3 + $0x78] sm:$0xff]
    %v367 = vld [vmem:[#allocation11] sm:$0xff]
    %v368 = vld [vmem:[#allocation11 + $0x8] sm:$0xff]
    %vm369 = vcmask 64512
    %v371 = vsel %vm369, %v335, 0
    %v374 = vsel %vm369, %v336, 0
    %v377 = vsel %vm369, %v351, 0
    %v380 = vsel %vm369, %v352, 0
    %382 = vmatpush.xpose.msra.mxu0 0.0
    %383 = vmatpush.xpose.msra.mxu0 0.0
    %384 = vmatpush.xpose.msra.mxu0 0.0
    %385 = vmatpush.xpose.msra.mxu0 0.0
    %386 = vmatpush.xpose.msra.mxu0 0.0
    %387 = vmatpush.xpose.msra.mxu0 0.0
    %388 = vmatpush.xpose.msra.mxu0 0.0
    %389 = vmatpush.xpose.msra.mxu0 0.0
    %390 = vmatpush.xpose.msra.mxu0 0.0
    %391 = vmatpush.xpose.msra.mxu0 0.0
    %392 = vmatpush.xpose.msra.mxu0 0.0
    %393 = vmatpush.xpose.msra.mxu0 0.0
    %394 = vmatpush.xpose.msra.mxu0 0.0
    %395 = vmatpush.xpose.msra.mxu0 0.0
    %396 = vmatpush.xpose.msra.mxu0 %v380
    %397 = vmatpush.xpose.msra.mxu0 %v377
    %398 = vmatmul.f32.gmra.mxu0 %v371
    %v399 = vpop.f32.mrf.mxu0
    %v400 = vadd.f32 %v367, %v399
    %401 = vmatmul.f32.gmra.mxu0 %v374
    %v402 = vpop.f32.mrf.mxu0
    %v403 = vadd.f32 %v368, %v402
    %404 = vdwg.mxu0
    %v406 = vsel %vm369, %v337, 0
    %v409 = vsel %vm369, %v338, 0
    %v412 = vsel %vm369, %v353, 0
    %v415 = vsel %vm369, %v354, 0
    %417 = vmatpush.xpose.msra.mxu0 0.0
    %418 = vmatpush.xpose.msra.mxu0 0.0
    %419 = vmatpush.xpose.msra.mxu0 0.0
    %420 = vmatpush.xpose.msra.mxu0 0.0
    %421 = vmatpush.xpose.msra.mxu0 0.0
    %422 = vmatpush.xpose.msra.mxu0 0.0
    %423 = vmatpush.xpose.msra.mxu0 0.0
    %424 = vmatpush.xpose.msra.mxu0 0.0
    %425 = vmatpush.xpose.msra.mxu0 0.0
    %426 = vmatpush.xpose.msra.mxu0 0.0
    %427 = vmatpush.xpose.msra.mxu0 0.0
    %428 = vmatpush.xpose.msra.mxu0 0.0
    %429 = vmatpush.xpose.msra.mxu0 0.0
    %430 = vmatpush.xpose.msra.mxu0 0.0
    %431 = vmatpush.xpose.msra.mxu0 %v415
    %432 = vmatpush.xpose.msra.mxu0 %v412
    %433 = vmatmul.f32.gmra.mxu0 %v406
    %v434 = vpop.f32.mrf.mxu0
    %v435 = vadd.f32 %v367, %v434
    %436 = vmatmul.f32.gmra.mxu0 %v409
    %v437 = vpop.f32.mrf.mxu0
    %v438 = vadd.f32 %v368, %v437
    %439 = vdwg.mxu0
    %v441 = vsel %vm369, %v339, 0
    %v444 = vsel %vm369, %v340, 0
    %v447 = vsel %vm369, %v355, 0
    %v450 = vsel %vm369, %v356, 0
    %452 = vmatpush.xpose.msra.mxu0 0.0
    %453 = vmatpush.xpose.msra.mxu0 0.0
    %454 = vmatpush.xpose.msra.mxu0 0.0
    %455 = vmatpush.xpose.msra.mxu0 0.0
    %456 = vmatpush.xpose.msra.mxu0 0.0
    %457 = vmatpush.xpose.msra.mxu0 0.0
    %458 = vmatpush.xpose.msra.mxu0 0.0
    %459 = vmatpush.xpose.msra.mxu0 0.0
    %460 = vmatpush.xpose.msra.mxu0 0.0
    %461 = vmatpush.xpose.msra.mxu0 0.0
    %462 = vmatpush.xpose.msra.mxu0 0.0
    %463 = vmatpush.xpose.msra.mxu0 0.0
    %464 = vmatpush.xpose.msra.mxu0 0.0
    %465 = vmatpush.xpose.msra.mxu0 0.0
    %466 = vmatpush.xpose.msra.mxu0 %v450
    %467 = vmatpush.xpose.msra.mxu0 %v447
    %468 = vmatmul.f32.gmra.mxu0 %v441
    %v469 = vpop.f32.mrf.mxu0
    %v470 = vadd.f32 %v367, %v469
    %471 = vmatmul.f32.gmra.mxu0 %v444
    %v472 = vpop.f32.mrf.mxu0
    %v473 = vadd.f32 %v368, %v472
    %474 = vdwg.mxu0
    %v476 = vsel %vm369, %v341, 0
    %v479 = vsel %vm369, %v342, 0
    %v482 = vsel %vm369, %v357, 0
    %v485 = vsel %vm369, %v358, 0
    %487 = vmatpush.xpose.msra.mxu0 0.0
    %488 = vmatpush.xpose.msra.mxu0 0.0
    %489 = vmatpush.xpose.msra.mxu0 0.0
    %490 = vmatpush.xpose.msra.mxu0 0.0
    %491 = vmatpush.xpose.msra.mxu0 0.0
    %492 = vmatpush.xpose.msra.mxu0 0.0
    %493 = vmatpush.xpose.msra.mxu0 0.0
    %494 = vmatpush.xpose.msra.mxu0 0.0
    %495 = vmatpush.xpose.msra.mxu0 0.0
    %496 = vmatpush.xpose.msra.mxu0 0.0
    %497 = vmatpush.xpose.msra.mxu0 0.0
    %498 = vmatpush.xpose.msra.mxu0 0.0
    %499 = vmatpush.xpose.msra.mxu0 0.0
    %500 = vmatpush.xpose.msra.mxu0 0.0
    %501 = vmatpush.xpose.msra.mxu0 %v485
    %502 = vmatpush.xpose.msra.mxu0 %v482
    %503 = vmatmul.f32.gmra.mxu0 %v476
    %v504 = vpop.f32.mrf.mxu0
    %v505 = vadd.f32 %v367, %v504
    %506 = vmatmul.f32.gmra.mxu0 %v479
    %v507 = vpop.f32.mrf.mxu0
    %v508 = vadd.f32 %v368, %v507
    %509 = vdwg.mxu0
    %v511 = vsel %vm369, %v343, 0
    %v514 = vsel %vm369, %v344, 0
    %v517 = vsel %vm369, %v359, 0
    %v520 = vsel %vm369, %v360, 0
    %522 = vmatpush.xpose.msra.mxu0 0.0
    %523 = vmatpush.xpose.msra.mxu0 0.0
    %524 = vmatpush.xpose.msra.mxu0 0.0
    %525 = vmatpush.xpose.msra.mxu0 0.0
    %526 = vmatpush.xpose.msra.mxu0 0.0
    %527 = vmatpush.xpose.msra.mxu0 0.0
    %528 = vmatpush.xpose.msra.mxu0 0.0
    %529 = vmatpush.xpose.msra.mxu0 0.0
    %530 = vmatpush.xpose.msra.mxu0 0.0
    %531 = vmatpush.xpose.msra.mxu0 0.0
    %532 = vmatpush.xpose.msra.mxu0 0.0
    %533 = vmatpush.xpose.msra.mxu0 0.0
    %534 = vmatpush.xpose.msra.mxu0 0.0
    %535 = vmatpush.xpose.msra.mxu0 0.0
    %536 = vmatpush.xpose.msra.mxu0 %v520
    %537 = vmatpush.xpose.msra.mxu0 %v517
    %538 = vmatmul.f32.gmra.mxu0 %v511
    %v539 = vpop.f32.mrf.mxu0
    %v540 = vadd.f32 %v367, %v539
    %541 = vmatmul.f32.gmra.mxu0 %v514
    %v542 = vpop.f32.mrf.mxu0
    %v543 = vadd.f32 %v368, %v542
    %544 = vdwg.mxu0
    %v546 = vsel %vm369, %v345, 0
    %v549 = vsel %vm369, %v346, 0
    %v552 = vsel %vm369, %v361, 0
    %v555 = vsel %vm369, %v362, 0
    %557 = vmatpush.xpose.msra.mxu0 0.0
    %558 = vmatpush.xpose.msra.mxu0 0.0
    %559 = vmatpush.xpose.msra.mxu0 0.0
    %560 = vmatpush.xpose.msra.mxu0 0.0
    %561 = vmatpush.xpose.msra.mxu0 0.0
    %562 = vmatpush.xpose.msra.mxu0 0.0
    %563 = vmatpush.xpose.msra.mxu0 0.0
    %564 = vmatpush.xpose.msra.mxu0 0.0
    %565 = vmatpush.xpose.msra.mxu0 0.0
    %566 = vmatpush.xpose.msra.mxu0 0.0
    %567 = vmatpush.xpose.msra.mxu0 0.0
    %568 = vmatpush.xpose.msra.mxu0 0.0
    %569 = vmatpush.xpose.msra.mxu0 0.0
    %570 = vmatpush.xpose.msra.mxu0 0.0
    %571 = vmatpush.xpose.msra.mxu0 %v555
    %572 = vmatpush.xpose.msra.mxu0 %v552
    %573 = vmatmul.f32.gmra.mxu0 %v546
    %v574 = vpop.f32.mrf.mxu0
    %v575 = vadd.f32 %v367, %v574
    %576 = vmatmul.f32.gmra.mxu0 %v549
    %v577 = vpop.f32.mrf.mxu0
    %v578 = vadd.f32 %v368, %v577
    %579 = vdwg.mxu0
    %v581 = vsel %vm369, %v347, 0
    %v584 = vsel %vm369, %v348, 0
    %v587 = vsel %vm369, %v363, 0
    %v590 = vsel %vm369, %v364, 0
    %592 = vmatpush.xpose.msra.mxu0 0.0
    %593 = vmatpush.xpose.msra.mxu0 0.0
    %594 = vmatpush.xpose.msra.mxu0 0.0
    %595 = vmatpush.xpose.msra.mxu0 0.0
    %596 = vmatpush.xpose.msra.mxu0 0.0
    %597 = vmatpush.xpose.msra.mxu0 0.0
    %598 = vmatpush.xpose.msra.mxu0 0.0
    %599 = vmatpush.xpose.msra.mxu0 0.0
    %600 = vmatpush.xpose.msra.mxu0 0.0
    %601 = vmatpush.xpose.msra.mxu0 0.0
    %602 = vmatpush.xpose.msra.mxu0 0.0
    %603 = vmatpush.xpose.msra.mxu0 0.0
    %604 = vmatpush.xpose.msra.mxu0 0.0
    %605 = vmatpush.xpose.msra.mxu0 0.0
    %606 = vmatpush.xpose.msra.mxu0 %v590
    %607 = vmatpush.xpose.msra.mxu0 %v587
    %608 = vmatmul.f32.gmra.mxu0 %v581
    %v609 = vpop.f32.mrf.mxu0
    %v610 = vadd.f32 %v367, %v609
    %611 = vmatmul.f32.gmra.mxu0 %v584
    %v612 = vpop.f32.mrf.mxu0
    %v613 = vadd.f32 %v368, %v612
    %614 = vdwg.mxu0
    %v616 = vsel %vm369, %v349, 0
    %v619 = vsel %vm369, %v350, 0
    %v622 = vsel %vm369, %v365, 0
    %v625 = vsel %vm369, %v366, 0
    %627 = vmatpush.xpose.msra.mxu0 0.0
    %628 = vmatpush.xpose.msra.mxu0 0.0
    %629 = vmatpush.xpose.msra.mxu0 0.0
    %630 = vmatpush.xpose.msra.mxu0 0.0
    %631 = vmatpush.xpose.msra.mxu0 0.0
    %632 = vmatpush.xpose.msra.mxu0 0.0
    %633 = vmatpush.xpose.msra.mxu0 0.0
    %634 = vmatpush.xpose.msra.mxu0 0.0
    %635 = vmatpush.xpose.msra.mxu0 0.0
    %636 = vmatpush.xpose.msra.mxu0 0.0
    %637 = vmatpush.xpose.msra.mxu0 0.0
    %638 = vmatpush.xpose.msra.mxu0 0.0
    %639 = vmatpush.xpose.msra.mxu0 0.0
    %640 = vmatpush.xpose.msra.mxu0 0.0
    %641 = vmatpush.xpose.msra.mxu0 %v625
    %642 = vmatpush.xpose.msra.mxu0 %v622
    %643 = vmatmul.f32.gmra.mxu0 %v616
    %v644 = vpop.f32.mrf.mxu0
    %v645 = vadd.f32 %v367, %v644
    %646 = vmatmul.f32.gmra.mxu0 %v619
    %v647 = vpop.f32.mrf.mxu0
    %v648 = vadd.f32 %v368, %v647
    %649 = vdwg.mxu0
    %vm650 = vcmask 130048
    %v651 = vsel %vm650, %v400, -inf
    %652 = vmax.xlane.f32.xlu0 %v651
    %v653 = vpop.xlane.xlu0 %652
    %v654 = vsel %vm650, %v403, -inf
    %655 = vmax.xlane.f32.xlu0 %v654
    %v656 = vpop.xlane.xlu0 %655
    %v657 = vsel %vm650, %v435, -inf
    %658 = vmax.xlane.f32.xlu0 %v657
    %v659 = vpop.xlane.xlu0 %658
    %v660 = vsel %vm650, %v438, -inf
    %661 = vmax.xlane.f32.xlu0 %v660
    %v662 = vpop.xlane.xlu0 %661
    %v663 = vsel %vm650, %v470, -inf
    %664 = vmax.xlane.f32.xlu0 %v663
    %v665 = vpop.xlane.xlu0 %664
    %v666 = vsel %vm650, %v473, -inf
    %667 = vmax.xlane.f32.xlu0 %v666
    %v668 = vpop.xlane.xlu0 %667
    %v669 = vsel %vm650, %v505, -inf
    %670 = vmax.xlane.f32.xlu0 %v669
    %v671 = vpop.xlane.xlu0 %670
    %v672 = vsel %vm650, %v508, -inf
    %673 = vmax.xlane.f32.xlu0 %v672
    %v674 = vpop.xlane.xlu0 %673
    %v675 = vsel %vm650, %v540, -inf
    %676 = vmax.xlane.f32.xlu0 %v675
    %v677 = vpop.xlane.xlu0 %676
    %v678 = vsel %vm650, %v543, -inf
    %679 = vmax.xlane.f32.xlu0 %v678
    %v680 = vpop.xlane.xlu0 %679
    %v681 = vsel %vm650, %v575, -inf
    %682 = vmax.xlane.f32.xlu0 %v681
    %v683 = vpop.xlane.xlu0 %682
    %v684 = vsel %vm650, %v578, -inf
    %685 = vmax.xlane.f32.xlu0 %v684
    %v686 = vpop.xlane.xlu0 %685
    %v687 = vsel %vm650, %v610, -inf
    %688 = vmax.xlane.f32.xlu0 %v687
    %v689 = vpop.xlane.xlu0 %688
    %v690 = vsel %vm650, %v613, -inf
    %691 = vmax.xlane.f32.xlu0 %v690
    %v692 = vpop.xlane.xlu0 %691
    %v693 = vsel %vm650, %v645, -inf
    %694 = vmax.xlane.f32.xlu0 %v693
    %v695 = vpop.xlane.xlu0 %694
    %v696 = vsel %vm650, %v648, -inf
    %697 = vmax.xlane.f32.xlu0 %v696
    %v698 = vpop.xlane.xlu0 %697
    %v699 = vsub.f32 %v400, %v653
    %v700 = vsub.f32 %v403, %v656
    %v701 = vsub.f32 %v435, %v659
    %v702 = vsub.f32 %v438, %v662
    %v703 = vsub.f32 %v470, %v665
    %v704 = vsub.f32 %v473, %v668
    %v705 = vsub.f32 %v505, %v671
    %v706 = vsub.f32 %v508, %v674
    %v707 = vsub.f32 %v540, %v677
    %v708 = vsub.f32 %v543, %v680
    %v709 = vsub.f32 %v575, %v683
    %v710 = vsub.f32 %v578, %v686
    %v711 = vsub.f32 %v610, %v689
    %v712 = vsub.f32 %v613, %v692
    %v713 = vsub.f32 %v645, %v695
    %v714 = vsub.f32 %v648, %v698
    %v715 = vmul.f32 %v699, 1.442695
    %v716 = vpow.pop %v715
    %v717 = vmul.f32 %v700, 1.442695
    %v718 = vpow.pop %v717
    %v719 = vmul.f32 %v701, 1.442695
    %v720 = vpow.pop %v719
    %v721 = vmul.f32 %v702, 1.442695
    %v722 = vpow.pop %v721
    %v723 = vmul.f32 %v703, 1.442695
    %v724 = vpow.pop %v723
    %v725 = vmul.f32 %v704, 1.442695
    %v726 = vpow.pop %v725
    %v727 = vmul.f32 %v705, 1.442695
    %v728 = vpow.pop %v727
    %v729 = vmul.f32 %v706, 1.442695
    %v730 = vpow.pop %v729
    %v731 = vmul.f32 %v707, 1.442695
    %v732 = vpow.pop %v731
    %v733 = vmul.f32 %v708, 1.442695
    %v734 = vpow.pop %v733
    %v735 = vmul.f32 %v709, 1.442695
    %v736 = vpow.pop %v735
    %v737 = vmul.f32 %v710, 1.442695
    %v738 = vpow.pop %v737
    %v739 = vmul.f32 %v711, 1.442695
    %v740 = vpow.pop %v739
    %v741 = vmul.f32 %v712, 1.442695
    %v742 = vpow.pop %v741
    %v743 = vmul.f32 %v713, 1.442695
    %v744 = vpow.pop %v743
    %v745 = vmul.f32 %v714, 1.442695
    %v746 = vpow.pop %v745
    %v747 = vsel %vm650, %v716, 0.0
    %748 = vadd.xlane.f32.xlu0 %v747
    %v749 = vpop.xlane.xlu0 %748
    %v750 = vsel %vm650, %v718, 0.0
    %751 = vadd.xlane.f32.xlu0 %v750
    %v752 = vpop.xlane.xlu0 %751
    %v753 = vsel %vm650, %v720, 0.0
    %754 = vadd.xlane.f32.xlu0 %v753
    %v755 = vpop.xlane.xlu0 %754
    %v756 = vsel %vm650, %v722, 0.0
    %757 = vadd.xlane.f32.xlu0 %v756
    %v758 = vpop.xlane.xlu0 %757
    %v759 = vsel %vm650, %v724, 0.0
    %760 = vadd.xlane.f32.xlu0 %v759
    %v761 = vpop.xlane.xlu0 %760
    %v762 = vsel %vm650, %v726, 0.0
    %763 = vadd.xlane.f32.xlu0 %v762
    %v764 = vpop.xlane.xlu0 %763
    %v765 = vsel %vm650, %v728, 0.0
    %766 = vadd.xlane.f32.xlu0 %v765
    %v767 = vpop.xlane.xlu0 %766
    %v768 = vsel %vm650, %v730, 0.0
    %769 = vadd.xlane.f32.xlu0 %v768
    %v770 = vpop.xlane.xlu0 %769
    %v771 = vsel %vm650, %v732, 0.0
    %772 = vadd.xlane.f32.xlu0 %v771
    %v773 = vpop.xlane.xlu0 %772
    %v774 = vsel %vm650, %v734, 0.0
    %775 = vadd.xlane.f32.xlu0 %v774
    %v776 = vpop.xlane.xlu0 %775
    %v777 = vsel %vm650, %v736, 0.0
    %778 = vadd.xlane.f32.xlu0 %v777
    %v779 = vpop.xlane.xlu0 %778
    %v780 = vsel %vm650, %v738, 0.0
    %781 = vadd.xlane.f32.xlu0 %v780
    %v782 = vpop.xlane.xlu0 %781
    %v783 = vsel %vm650, %v740, 0.0
    %784 = vadd.xlane.f32.xlu0 %v783
    %v785 = vpop.xlane.xlu0 %784
    %v786 = vsel %vm650, %v742, 0.0
    %787 = vadd.xlane.f32.xlu0 %v786
    %v788 = vpop.xlane.xlu0 %787
    %v789 = vsel %vm650, %v744, 0.0
    %790 = vadd.xlane.f32.xlu0 %v789
    %v791 = vpop.xlane.xlu0 %790
    %v792 = vsel %vm650, %v746, 0.0
    %793 = vadd.xlane.f32.xlu0 %v792
    %v794 = vpop.xlane.xlu0 %793
    %v795 = vrcp.pop %v749
    %v796 = vrcp.pop %v752
    %v797 = vrcp.pop %v755
    %v798 = vrcp.pop %v758
    %v799 = vrcp.pop %v761
    %v800 = vrcp.pop %v764
    %v801 = vrcp.pop %v767
    %v802 = vrcp.pop %v770
    %v803 = vrcp.pop %v773
    %v804 = vrcp.pop %v776
    %v805 = vrcp.pop %v779
    %v806 = vrcp.pop %v782
    %v807 = vrcp.pop %v785
    %v808 = vrcp.pop %v788
    %v809 = vrcp.pop %v791
    %v810 = vrcp.pop %v794
    %v811 = vmul.f32 %v749, %v795
    %v812 = vmul.f32 %v752, %v796
    %v813 = vmul.f32 %v755, %v797
    %v814 = vmul.f32 %v758, %v798
    %v815 = vmul.f32 %v761, %v799
    %v816 = vmul.f32 %v764, %v800
    %v817 = vmul.f32 %v767, %v801
    %v818 = vmul.f32 %v770, %v802
    %v819 = vmul.f32 %v773, %v803
    %v820 = vmul.f32 %v776, %v804
    %v821 = vmul.f32 %v779, %v805
    %v822 = vmul.f32 %v782, %v806
    %v823 = vmul.f32 %v785, %v807
    %v824 = vmul.f32 %v788, %v808
    %v825 = vmul.f32 %v791, %v809
    %v826 = vmul.f32 %v794, %v810
    %v827 = vsub.f32 2.0, %v811
    %v828 = vsub.f32 2.0, %v812
    %v829 = vsub.f32 2.0, %v813
    %v830 = vsub.f32 2.0, %v814
    %v831 = vsub.f32 2.0, %v815
    %v832 = vsub.f32 2.0, %v816
    %v833 = vsub.f32 2.0, %v817
    %v834 = vsub.f32 2.0, %v818
    %v835 = vsub.f32 2.0, %v819
    %v836 = vsub.f32 2.0, %v820
    %v837 = vsub.f32 2.0, %v821
    %v838 = vsub.f32 2.0, %v822
    %v839 = vsub.f32 2.0, %v823
    %v840 = vsub.f32 2.0, %v824
    %v841 = vsub.f32 2.0, %v825
    %v842 = vsub.f32 2.0, %v826
    %v843 = vmul.f32 %v795, %v827
    %v844 = vmul.f32 %v796, %v828
    %v845 = vmul.f32 %v797, %v829
    %v846 = vmul.f32 %v798, %v830
    %v847 = vmul.f32 %v799, %v831
    %v848 = vmul.f32 %v800, %v832
    %v849 = vmul.f32 %v801, %v833
    %v850 = vmul.f32 %v802, %v834
    %v851 = vmul.f32 %v803, %v835
    %v852 = vmul.f32 %v804, %v836
    %v853 = vmul.f32 %v805, %v837
    %v854 = vmul.f32 %v806, %v838
    %v855 = vmul.f32 %v807, %v839
    %v856 = vmul.f32 %v808, %v840
    %v857 = vmul.f32 %v809, %v841
    %v858 = vmul.f32 %v810, %v842
    %v859 = vmul.f32 %v716, %v843
    %v860 = vmul.f32 %v718, %v844
    %v861 = vmul.f32 %v720, %v845
    %v862 = vmul.f32 %v722, %v846
    %v863 = vmul.f32 %v724, %v847
    %v864 = vmul.f32 %v726, %v848
    %v865 = vmul.f32 %v728, %v849
    %v866 = vmul.f32 %v730, %v850
    %v867 = vmul.f32 %v732, %v851
    %v868 = vmul.f32 %v734, %v852
    %v869 = vmul.f32 %v736, %v853
    %v870 = vmul.f32 %v738, %v854
    %v871 = vmul.f32 %v740, %v855
    %v872 = vmul.f32 %v742, %v856
    %v873 = vmul.f32 %v744, %v857
    %v874 = vmul.f32 %v746, %v858
    %875 = vst.msk [vmem:[#allocation14] sm:$0xff] %vm650, %v859
    %876 = vst.msk [vmem:[#allocation14 + $0x8] sm:$0xff] %vm650, %v860
    %877 = vst.msk [vmem:[#allocation14 + $0x10] sm:$0xff] %vm650, %v861
    %878 = vst.msk [vmem:[#allocation14 + $0x18] sm:$0xff] %vm650, %v862
    %879 = vst.msk [vmem:[#allocation14 + $0x20] sm:$0xff] %vm650, %v863
    %880 = vst.msk [vmem:[#allocation14 + $0x28] sm:$0xff] %vm650, %v864
    %881 = vst.msk [vmem:[#allocation14 + $0x30] sm:$0xff] %vm650, %v865
    %882 = vst.msk [vmem:[#allocation14 + $0x38] sm:$0xff] %vm650, %v866
    %883 = vst.msk [vmem:[#allocation14 + $0x40] sm:$0xff] %vm650, %v867
    %884 = vst.msk [vmem:[#allocation14 + $0x48] sm:$0xff] %vm650, %v868
    %885 = vst.msk [vmem:[#allocation14 + $0x50] sm:$0xff] %vm650, %v869
    %886 = vst.msk [vmem:[#allocation14 + $0x58] sm:$0xff] %vm650, %v870
    %887 = vst.msk [vmem:[#allocation14 + $0x60] sm:$0xff] %vm650, %v871
    %888 = vst.msk [vmem:[#allocation14 + $0x68] sm:$0xff] %vm650, %v872
    %889 = vst.msk [vmem:[#allocation14 + $0x70] sm:$0xff] %vm650, %v873
    %890 = vst.msk [vmem:[#allocation14 + $0x78] sm:$0xff] %vm650, %v874
    %v891 = vld [vmem:[#allocation4] sm:$0xff]
    %v892 = vld [vmem:[#allocation4 + $0x8] sm:$0xff]
    %v893 = vld [vmem:[#allocation4 + $0x10] sm:$0xff]
    %v894 = vld [vmem:[#allocation4 + $0x18] sm:$0xff]
    %v895 = vld [vmem:[#allocation4 + $0x20] sm:$0xff]
    %v896 = vld [vmem:[#allocation4 + $0x28] sm:$0xff]
    %v897 = vld [vmem:[#allocation4 + $0x30] sm:$0xff]
    %v898 = vld [vmem:[#allocation4 + $0x38] sm:$0xff]
    %v899 = vld [vmem:[#allocation4 + $0x40] sm:$0xff]
    %v900 = vld [vmem:[#allocation4 + $0x48] sm:$0xff]
    %v901 = vld [vmem:[#allocation4 + $0x50] sm:$0xff]
    %v902 = vld [vmem:[#allocation4 + $0x58] sm:$0xff]
    %v903 = vld [vmem:[#allocation4 + $0x60] sm:$0xff]
    %v904 = vld [vmem:[#allocation4 + $0x68] sm:$0xff]
    %v905 = vld [vmem:[#allocation4 + $0x70] sm:$0xff]
    %v906 = vld [vmem:[#allocation4 + $0x78] sm:$0xff]
    %v908 = vsel %vm650, %v859, 0
    %v911 = vsel %vm650, %v860, 0
    %913 = vmatpush.msra.mxu0 0.0
    %914 = vmatpush.msra.mxu0 0.0
    %915 = vmatpush.msra.mxu0 0.0
    %916 = vmatpush.msra.mxu0 0.0
    %917 = vmatpush.msra.mxu0 0.0
    %918 = vmatpush.msra.mxu0 0.0
    %919 = vmatpush.msra.mxu0 0.0
    %920 = vmatpush.msra.mxu0 0.0
    %921 = vmatpush.msra.mxu0 0.0
    %922 = vmatpush.msra.mxu0 0.0
    %923 = vmatpush.msra.mxu0 0.0
    %924 = vmatpush.msra.mxu0 0.0
    %925 = vmatpush.msra.mxu0 0.0
    %926 = vmatpush.msra.mxu0 0.0
    %927 = vmatpush.msra.mxu0 %v892
    %928 = vmatpush.msra.mxu0 %v891
    %929 = vmatmul.f32.gmra.mxu0 %v908
    %v930 = vpop.f32.mrf.mxu0
    %v931 = vadd.f32 0.0, %v930
    %932 = vmatmul.f32.gmra.mxu0 %v911
    %v933 = vpop.f32.mrf.mxu0
    %v934 = vadd.f32 0.0, %v933
    %935 = vdwg.mxu0
    %v937 = vsel %vm650, %v861, 0
    %v940 = vsel %vm650, %v862, 0
    %942 = vmatpush.msra.mxu0 0.0
    %943 = vmatpush.msra.mxu0 0.0
    %944 = vmatpush.msra.mxu0 0.0
    %945 = vmatpush.msra.mxu0 0.0
    %946 = vmatpush.msra.mxu0 0.0
    %947 = vmatpush.msra.mxu0 0.0
    %948 = vmatpush.msra.mxu0 0.0
    %949 = vmatpush.msra.mxu0 0.0
    %950 = vmatpush.msra.mxu0 0.0
    %951 = vmatpush.msra.mxu0 0.0
    %952 = vmatpush.msra.mxu0 0.0
    %953 = vmatpush.msra.mxu0 0.0
    %954 = vmatpush.msra.mxu0 0.0
    %955 = vmatpush.msra.mxu0 0.0
    %956 = vmatpush.msra.mxu0 %v894
    %957 = vmatpush.msra.mxu0 %v893
    %958 = vmatmul.f32.gmra.mxu0 %v937
    %v959 = vpop.f32.mrf.mxu0
    %v960 = vadd.f32 0.0, %v959
    %961 = vmatmul.f32.gmra.mxu0 %v940
    %v962 = vpop.f32.mrf.mxu0
    %v963 = vadd.f32 0.0, %v962
    %964 = vdwg.mxu0
    %v966 = vsel %vm650, %v863, 0
    %v969 = vsel %vm650, %v864, 0
    %971 = vmatpush.msra.mxu0 0.0
    %972 = vmatpush.msra.mxu0 0.0
    %973 = vmatpush.msra.mxu0 0.0
    %974 = vmatpush.msra.mxu0 0.0
    %975 = vmatpush.msra.mxu0 0.0
    %976 = vmatpush.msra.mxu0 0.0
    %977 = vmatpush.msra.mxu0 0.0
    %978 = vmatpush.msra.mxu0 0.0
    %979 = vmatpush.msra.mxu0 0.0
    %980 = vmatpush.msra.mxu0 0.0
    %981 = vmatpush.msra.mxu0 0.0
    %982 = vmatpush.msra.mxu0 0.0
    %983 = vmatpush.msra.mxu0 0.0
    %984 = vmatpush.msra.mxu0 0.0
    %985 = vmatpush.msra.mxu0 %v896
    %986 = vmatpush.msra.mxu0 %v895
    %987 = vmatmul.f32.gmra.mxu0 %v966
    %v988 = vpop.f32.mrf.mxu0
    %v989 = vadd.f32 0.0, %v988
    %990 = vmatmul.f32.gmra.mxu0 %v969
    %v991 = vpop.f32.mrf.mxu0
    %v992 = vadd.f32 0.0, %v991
    %993 = vdwg.mxu0
    %v995 = vsel %vm650, %v865, 0
    %v998 = vsel %vm650, %v866, 0
    %1000 = vmatpush.msra.mxu0 0.0
    %1001 = vmatpush.msra.mxu0 0.0
    %1002 = vmatpush.msra.mxu0 0.0
    %1003 = vmatpush.msra.mxu0 0.0
    %1004 = vmatpush.msra.mxu0 0.0
    %1005 = vmatpush.msra.mxu0 0.0
    %1006 = vmatpush.msra.mxu0 0.0
    %1007 = vmatpush.msra.mxu0 0.0
    %1008 = vmatpush.msra.mxu0 0.0
    %1009 = vmatpush.msra.mxu0 0.0
    %1010 = vmatpush.msra.mxu0 0.0
    %1011 = vmatpush.msra.mxu0 0.0
    %1012 = vmatpush.msra.mxu0 0.0
    %1013 = vmatpush.msra.mxu0 0.0
    %1014 = vmatpush.msra.mxu0 %v898
    %1015 = vmatpush.msra.mxu0 %v897
    %1016 = vmatmul.f32.gmra.mxu0 %v995
    %v1017 = vpop.f32.mrf.mxu0
    %v1018 = vadd.f32 0.0, %v1017
    %1019 = vmatmul.f32.gmra.mxu0 %v998
    %v1020 = vpop.f32.mrf.mxu0
    %v1021 = vadd.f32 0.0, %v1020
    %1022 = vdwg.mxu0
    %v1024 = vsel %vm650, %v867, 0
    %v1027 = vsel %vm650, %v868, 0
    %1029 = vmatpush.msra.mxu0 0.0
    %1030 = vmatpush.msra.mxu0 0.0
    %1031 = vmatpush.msra.mxu0 0.0
    %1032 = vmatpush.msra.mxu0 0.0
    %1033 = vmatpush.msra.mxu0 0.0
    %1034 = vmatpush.msra.mxu0 0.0
    %1035 = vmatpush.msra.mxu0 0.0
    %1036 = vmatpush.msra.mxu0 0.0
    %1037 = vmatpush.msra.mxu0 0.0
    %1038 = vmatpush.msra.mxu0 0.0
    %1039 = vmatpush.msra.mxu0 0.0
    %1040 = vmatpush.msra.mxu0 0.0
    %1041 = vmatpush.msra.mxu0 0.0
    %1042 = vmatpush.msra.mxu0 0.0
    %1043 = vmatpush.msra.mxu0 %v900
    %1044 = vmatpush.msra.mxu0 %v899
    %1045 = vmatmul.f32.gmra.mxu0 %v1024
    %v1046 = vpop.f32.mrf.mxu0
    %v1047 = vadd.f32 0.0, %v1046
    %1048 = vmatmul.f32.gmra.mxu0 %v1027
    %v1049 = vpop.f32.mrf.mxu0
    %v1050 = vadd.f32 0.0, %v1049
    %1051 = vdwg.mxu0
    %v1053 = vsel %vm650, %v869, 0
    %v1056 = vsel %vm650, %v870, 0
    %1058 = vmatpush.msra.mxu0 0.0
    %1059 = vmatpush.msra.mxu0 0.0
    %1060 = vmatpush.msra.mxu0 0.0
    %1061 = vmatpush.msra.mxu0 0.0
    %1062 = vmatpush.msra.mxu0 0.0
    %1063 = vmatpush.msra.mxu0 0.0
    %1064 = vmatpush.msra.mxu0 0.0
    %1065 = vmatpush.msra.mxu0 0.0
    %1066 = vmatpush.msra.mxu0 0.0
    %1067 = vmatpush.msra.mxu0 0.0
    %1068 = vmatpush.msra.mxu0 0.0
    %1069 = vmatpush.msra.mxu0 0.0
    %1070 = vmatpush.msra.mxu0 0.0
    %1071 = vmatpush.msra.mxu0 0.0
    %1072 = vmatpush.msra.mxu0 %v902
    %1073 = vmatpush.msra.mxu0 %v901
    %1074 = vmatmul.f32.gmra.mxu0 %v1053
    %v1075 = vpop.f32.mrf.mxu0
    %v1076 = vadd.f32 0.0, %v1075
    %1077 = vmatmul.f32.gmra.mxu0 %v1056
    %v1078 = vpop.f32.mrf.mxu0
    %v1079 = vadd.f32 0.0, %v1078
    %1080 = vdwg.mxu0
    %v1082 = vsel %vm650, %v871, 0
    %v1085 = vsel %vm650, %v872, 0
    %1087 = vmatpush.msra.mxu0 0.0
    %1088 = vmatpush.msra.mxu0 0.0
    %1089 = vmatpush.msra.mxu0 0.0
    %1090 = vmatpush.msra.mxu0 0.0
    %1091 = vmatpush.msra.mxu0 0.0
    %1092 = vmatpush.msra.mxu0 0.0
    %1093 = vmatpush.msra.mxu0 0.0
    %1094 = vmatpush.msra.mxu0 0.0
    %1095 = vmatpush.msra.mxu0 0.0
    %1096 = vmatpush.msra.mxu0 0.0
    %1097 = vmatpush.msra.mxu0 0.0
    %1098 = vmatpush.msra.mxu0 0.0
    %1099 = vmatpush.msra.mxu0 0.0
    %1100 = vmatpush.msra.mxu0 0.0
    %1101 = vmatpush.msra.mxu0 %v904
    %1102 = vmatpush.msra.mxu0 %v903
    %1103 = vmatmul.f32.gmra.mxu0 %v1082
    %v1104 = vpop.f32.mrf.mxu0
    %v1105 = vadd.f32 0.0, %v1104
    %1106 = vmatmul.f32.gmra.mxu0 %v1085
    %v1107 = vpop.f32.mrf.mxu0
    %v1108 = vadd.f32 0.0, %v1107
    %1109 = vdwg.mxu0
    %v1111 = vsel %vm650, %v873, 0
    %v1114 = vsel %vm650, %v874, 0
    %1116 = vmatpush.msra.mxu0 0.0
    %1117 = vmatpush.msra.mxu0 0.0
    %1118 = vmatpush.msra.mxu0 0.0
    %1119 = vmatpush.msra.mxu0 0.0
    %1120 = vmatpush.msra.mxu0 0.0
    %1121 = vmatpush.msra.mxu0 0.0
    %1122 = vmatpush.msra.mxu0 0.0
    %1123 = vmatpush.msra.mxu0 0.0
    %1124 = vmatpush.msra.mxu0 0.0
    %1125 = vmatpush.msra.mxu0 0.0
    %1126 = vmatpush.msra.mxu0 0.0
    %1127 = vmatpush.msra.mxu0 0.0
    %1128 = vmatpush.msra.mxu0 0.0
    %1129 = vmatpush.msra.mxu0 0.0
    %1130 = vmatpush.msra.mxu0 %v906
    %1131 = vmatpush.msra.mxu0 %v905
    %1132 = vmatmul.f32.gmra.mxu0 %v1111
    %v1133 = vpop.f32.mrf.mxu0
    %v1134 = vadd.f32 0.0, %v1133
    %1135 = vmatmul.f32.gmra.mxu0 %v1114
    %v1136 = vpop.f32.mrf.mxu0
    %v1137 = vadd.f32 0.0, %v1136
    %1138 = vdwg.mxu0
    %1143 = vrot.lane.b32.xlu0 %v960, 8
    %v1144 = vpop.permute.xlu0 %1143
    %1145 = vrot.lane.b32.xlu0 %v963, 8
    %v1146 = vpop.permute.xlu0 %1145
    %1147 = vrot.lane.b32.xlu0 %v1076, 8
    %v1148 = vpop.permute.xlu0 %1147
    %1149 = vrot.lane.b32.xlu0 %v1079, 8
    %v1150 = vpop.permute.xlu0 %1149
    %1159 = vrot.lane.b32.xlu0 %v989, 16
    %v1160 = vpop.permute.xlu0 %1159
    %1161 = vrot.lane.b32.xlu0 %v992, 16
    %v1162 = vpop.permute.xlu0 %1161
    %1163 = vrot.lane.b32.xlu0 %v1105, 16
    %v1164 = vpop.permute.xlu0 %1163
    %1165 = vrot.lane.b32.xlu0 %v1108, 16
    %v1166 = vpop.permute.xlu0 %1165
    %1175 = vrot.lane.b32.xlu0 %v1018, 24
    %v1176 = vpop.permute.xlu0 %1175
    %1177 = vrot.lane.b32.xlu0 %v1021, 24
    %v1178 = vpop.permute.xlu0 %1177
    %1179 = vrot.lane.b32.xlu0 %v1134, 24
    %v1180 = vpop.permute.xlu0 %1179
    %1181 = vrot.lane.b32.xlu0 %v1137, 24
    %v1182 = vpop.permute.xlu0 %1181
    %v1187 = vsel %vm369, %v931, %v1144
    %v1188 = vsel %vm369, %v934, %v1146
    %v1189 = vsel %vm369, %v1047, %v1148
    %v1190 = vsel %vm369, %v1050, %v1150
    %v1191 = vsel %vm650, %v1187, %v1160
    %v1192 = vsel %vm650, %v1188, %v1162
    %v1193 = vsel %vm650, %v1189, %v1164
    %v1194 = vsel %vm650, %v1190, %v1166
    %vm1195 = vcmask 195584
    %v1196 = vsel %vm1195, %v1191, %v1176
    %v1197 = vsel %vm1195, %v1192, %v1178
    %v1198 = vsel %vm1195, %v1193, %v1180
    %v1199 = vsel %vm1195, %v1194, %v1182
    %v1200 = vld [vmem:[#allocation10] sm:$0xff]
    %v1201 = vld [vmem:[#allocation10 + $0x8] sm:$0xff]
    %v1202 = vld [vmem:[#allocation10 + $0x10] sm:$0xff]
    %v1203 = vld [vmem:[#allocation10 + $0x18] sm:$0xff]
    %v1204 = vld [vmem:[%s4] sm:$0x1]
    %v1206 = vperm.slane %v1204, 0
    %vm1208 = vcmask 261120
    %v1210 = vsel %vm1208, %v1196, 0
    %v1213 = vsel %vm1208, %v1197, 0
    %v1216 = vsel %vm1208, %v1198, 0
    %v1219 = vsel %vm1208, %v1199, 0
    %1221 = vmatpush.msra.mxu0 0.0
    %1222 = vmatpush.msra.mxu0 0.0
    %1223 = vmatpush.msra.mxu0 0.0
    %1224 = vmatpush.msra.mxu0 0.0
    %1225 = vmatpush.msra.mxu0 0.0
    %1226 = vmatpush.msra.mxu0 0.0
    %1227 = vmatpush.msra.mxu0 0.0
    %1228 = vmatpush.msra.mxu0 0.0
    %1229 = vmatpush.msra.mxu0 0.0
    %1230 = vmatpush.msra.mxu0 0.0
    %1231 = vmatpush.msra.mxu0 0.0
    %1232 = vmatpush.msra.mxu0 0.0
    %1233 = vmatpush.msra.mxu0 %v1203
    %1234 = vmatpush.msra.mxu0 %v1202
    %1235 = vmatpush.msra.mxu0 %v1201
    %1236 = vmatpush.msra.mxu0 %v1200
    %1237 = vmatmul.f32.gmra.mxu0 %v1210
    %v1238 = vpop.f32.mrf.mxu0
    %v1239 = vadd.f32 %v1206, %v1238
    %1240 = vmatmul.f32.gmra.mxu0 %v1213
    %v1241 = vpop.f32.mrf.mxu0
    %v1242 = vadd.f32 %v1206, %v1241
    %1243 = vmatmul.f32.gmra.mxu0 %v1216
    %v1244 = vpop.f32.mrf.mxu0
    %v1245 = vadd.f32 %v1206, %v1244
    %1246 = vmatmul.f32.gmra.mxu0 %v1219
    %v1247 = vpop.f32.mrf.mxu0
    %v1248 = vadd.f32 %v1206, %v1247
    %1249 = vdwg.mxu0
    %1250 = vst.msk [vmem:[#allocation13] sm:$0xff] %vm1208, %v1239
    %1251 = vst.msk [vmem:[#allocation13 + $0x8] sm:$0xff] %vm1208, %v1242
    %1252 = vst.msk [vmem:[#allocation13 + $0x10] sm:$0xff] %vm1208, %v1245
    %1253 = vst.msk [vmem:[#allocation13 + $0x18] sm:$0xff] %vm1208, %v1248
    // Predicated region
    $region46: #{tpu_custom_call.1} parent=1 // pred_check
      _
    $region47: #{tpu_custom_call.1} parent=1 // pred_check_branch
      %1255 = sbr.rel (0) target = $region49
    $region48: #{tpu_custom_call.1} parent=1 // pred_region
      %1257 = vsyncadd [#allocation7], 0
      %s1258 = sshll.u32 [#allocation13], 4
      %s1259 = int_to_ptr.vmem [resolvable:$true] %s1258
      %s1260 = sshll.u32 %s6, 4
      %s1261 = int_to_ptr.hbm [resolvable:$true] %s1260
      %1266 = dma.vmem_to_hbm [thread:$0]  %s1259, 512, %s1261, [#allocation7], 128, 128, 8
    $region49: #{tpu_custom_call.1} parent=1 // pred_fallthru
      _
    // Predicated region
    $region50: #{tpu_custom_call.1} parent=1 // pred_check
      _
    $region51: #{tpu_custom_call.1} parent=1 // pred_check_branch
      %1268 = sbr.rel (0) target = $region53
    $region52: #{tpu_custom_call.1} parent=1 // pred_region
      %1270 = vsyncadd [#allocation15], 0
      %s1271 = sshll.u32 [#allocation14], 4
      %s1272 = int_to_ptr.vmem [resolvable:$true] %s1271
      %s1273 = sshll.u32 %s7, 4
      %s1274 = int_to_ptr.hbm [resolvable:$true] %s1273
      %1279 = dma.vmem_to_hbm [thread:$0]  %s1272, 2048, %s1274, [#allocation15], 128, 128, 8
    $region53: #{tpu_custom_call.1} parent=1 // pred_fallthru
      _
    // Predicated region
    $region54: #{tpu_custom_call.1} parent=1 // pred_check
      _
    $region55: #{tpu_custom_call.1} parent=1 // pred_check_branch
      %1281 = sbr.rel (0) target = $region57
    $region56: #{tpu_custom_call.1} parent=1 // pred_region
      %1283 = dma.done [#allocation7], 512
    $region57: #{tpu_custom_call.1} parent=1 // pred_fallthru
      _
    // Predicated region
    $region58: #{tpu_custom_call.1} parent=1 // pred_check
      _
    $region59: #{tpu_custom_call.1} parent=1 // pred_check_branch
      %1285 = sbr.rel (0) target = $region61
    $region60: #{tpu_custom_call.1} parent=1 // pred_region
      %1287 = dma.done [#allocation15], 2048
    $region61: #{tpu_custom_call.1} parent=1 // pred_fallthru
      _
    %1288 = vsyncpa [#allocation6], 1
    %1289 = vsyncpa [#allocation9], 1
    %1290 = vsyncpa [#allocation12], 1
    %1291 = vsyncpa [#allocation7], 1
    %1292 = vsyncpa [#allocation15], 1

</llo_original>
